<compile_context>
chip_gen: v7x
topology: tpu7x:2x2x1
jax: 0.10.0
libtpu: 0.0.40
codegen_flags: <defaults>
</compile_context>

<pallas_src>
import functools

import jax
import jax.numpy as jnp
from jax.experimental import pallas as pl
from jax.experimental.pallas import tpu as pltpu


def _round_up(x, m):
    return (x + m - 1) // m * m


def _cdiv(a, b):
    return (a + b - 1) // b


def _encode_and_argmin(patches_ref, wenc_ref, benc_ref, e_ref, esq_ref, chunks):
    """Patch-projection encode + streaming nearest-codebook argmin.

    Returns int32 codebook indices of shape (1, TILE_N) (tokens on lanes).
    """
    # ---- synthetic encoder: z = W_enc^T @ patches + b  (f32 MXU) ----
    z = jnp.dot(wenc_ref[...], patches_ref[...],
                preferred_element_type=jnp.float32)            # (D_pad, TILE_N)
    z = z + benc_ref[...]                                      # + (D_pad, 1)
    # Pre-scale once by -2 (exact power-of-two) so the chunk loop is add-only:
    #   dist(k, n) = ||e_k||^2 - 2 e_k . z_n   (||z_n||^2 dropped: same argmin)
    z_m2 = -2.0 * z

    tile_n = patches_ref.shape[1]

    # Running per-sublane-row minima, folded across every 8-row slab of every
    # chunk (one compare + two selects per slab); the winning global codebook
    # index is reconstructed at the end from (slab id, sublane row).
    best_d8 = jnp.full((8, tile_n), jnp.inf, jnp.float32)
    best_s8 = jnp.zeros((8, tile_n), jnp.int32)                # global slab id

    for off, sz in chunks:
        e_c = e_ref[pl.ds(off, sz), :]                         # (sz, D_pad)
        esq_c = esq_ref[pl.ds(off, sz), :]                     # (sz, 1)
        dots = jnp.dot(e_c, z_m2,
                       preferred_element_type=jnp.float32)     # (sz, TILE_N)
        dist = esq_c + dots
        base_slab = off // 8
        for s in range(sz // 8):
            d_s = dist[s * 8:(s + 1) * 8]                      # (8, TILE_N)
            take = d_s < best_d8          # strict <: earlier index wins ties
            best_d8 = jnp.where(take, d_s, best_d8)
            best_s8 = jnp.where(take, base_slab + s, best_s8)

    # Final 8 -> 1 reduction, tie-broken to the smallest global index.
    row_iota = jax.lax.broadcasted_iota(jnp.int32, (8, tile_n), 0)
    best_i8 = best_s8 * 8 + row_iota                           # global index
    loc_min = jnp.min(best_d8, axis=0, keepdims=True)          # (1, TILE_N)
    sentinel = jnp.int32(2 ** 30)
    idx = jnp.min(jnp.where(best_d8 == loc_min, best_i8, sentinel),
                  axis=0, keepdims=True).astype(jnp.int32)     # (1, TILE_N)
    return idx


def _vq_seq_kernel(patches_ref, wenc_ref, benc_ref, e_ref, esq_ref,
                   seq_ref, *, chunks):
    idx = _encode_and_argmin(patches_ref, wenc_ref, benc_ref, e_ref, esq_ref,
                             chunks)
    seq_ref[...] = idx                                         # lane-dense store


def _vq_embed_kernel(patches_ref, wenc_ref, benc_ref, e_ref, et_ref, esq_ref,
                     embed_ref, *, chunks):
    idx = _encode_and_argmin(patches_ref, wenc_ref, benc_ref, e_ref, esq_ref,
                             chunks)                           # (1, TILE_N)
    tile_n = idx.shape[1]
    d_pad = et_ref.shape[0]
    k_chunk = max(sz for _, sz in chunks)

    # Exact embedding lookup as chunked one_hot @ E^T, accumulated in a local
    # f32 value (no zero-fill / read-modify-write through the output ref) and
    # stored once.  The chunk-local iota is hoisted out of the loop.
    # TODO(synk): replace with a row gather / token-major matmul (drops e_trn).
    iota_loc = jax.lax.broadcasted_iota(jnp.int32, (k_chunk, tile_n), 0)
    acc = jnp.zeros((d_pad, tile_n), jnp.float32)
    for off, sz in chunks:
        iota_c = iota_loc if sz == k_chunk else iota_loc[:sz]
        onehot = (iota_c == (idx - off)).astype(jnp.float32)   # (sz, TILE_N)
        et_c = et_ref[:, pl.ds(off, sz)]                       # (D_pad, sz)
        acc = acc + jnp.dot(et_c, onehot,
                            preferred_element_type=jnp.float32)
    embed_ref[...] = acc


@functools.partial(jax.jit, static_argnames=("codebook", "patch"))
def vqgan_vae_embed(x, w_enc, b_enc, embedding_weight, *, codebook=True,
                    patch=4):
    """Pallas implementation of VQGanVAEEmbed.forward.

    x: (b, c, H, W) float32 NCHW.
    w_enc: (c*patch*patch, d) synthetic encoder projection.
    b_enc: (1, d) encoder bias.
    embedding_weight: (num_tokens, d) codebook / embedding table.
    Returns codebook indices (b, n) int32 if `codebook` is falsy, else the
    embedded map (b, d, h, w) float32.
    """
    b, c, H, W = x.shape
    h, w = H // patch, W // patch
    n = h * w
    N = b * n
    F = c * patch * patch
    K, d = embedding_weight.shape

    # ---- tiling ----
    n_pad128 = _round_up(N, 128)
    tile_n = min(512, n_pad128)                 # multiple of 128
    # prefer >= 2 token tiles so the "parallel" axis can use both v7x TCs
    while tile_n > 128 and _cdiv(n_pad128, tile_n) < 2:
        tile_n = _round_up(tile_n // 2, 128)
    N_pad = _round_up(n_pad128, tile_n)
    num_tiles = N_pad // tile_n

    D_pad = _round_up(d, 128)                   # lane-dense embed dim
    K_pad = _round_up(K, 128)                   # pad to 128 only (no over-pad)
    k_chunk = min(256, K_pad)                   # bounds the (Kc, TILE_N) block
    chunks = []
    off = 0
    while off < K_pad:
        sz = min(k_chunk, K_pad - off)          # multiples of 128
        chunks.append((off, sz))
        off += sz
    chunks = tuple(chunks)
    # TODO(synk): when len(chunks) is large, switch the unrolled Python chunk
    # loops to lax.fori_loop(..., unroll=2) to bound vreg live ranges.

    # ---- patchify to token-on-lanes layout (F, N) (stride=patch im2col) ----
    # TODO(synk): fold this into the kernel in_spec index_map over (b, h, w).
    xf = x.astype(jnp.float32)
    patches_t = (xf.reshape(b, c, h, patch, w, patch)
                   .transpose(1, 3, 5, 0, 2, 4)                # (c, p, p, b, h, w)
                   .reshape(F, N))
    patches_t = jnp.pad(patches_t, ((0, 0), (0, N_pad - N)))

    # ---- hoisted parameter prep (once, outside the grid) ----
    w_enc_t = jnp.pad(w_enc.astype(jnp.float32).T,
                      ((0, D_pad - d), (0, 0)))                # (D_pad, F)
    b_enc_c = jnp.pad(b_enc.astype(jnp.float32).reshape(d, 1),
                      ((0, D_pad - d), (0, 0)))                # (D_pad, 1)
    e_f = embedding_weight.astype(jnp.float32)
    e_sq = jnp.sum(e_f * e_f, axis=1, keepdims=True)           # (K, 1)
    e_nat = jnp.pad(e_f, ((0, K_pad - K), (0, D_pad - d)))     # (K_pad, D_pad)
    # padded codebook rows get a huge ||e||^2 so they can never win the argmin
    e_sq_p = jnp.pad(e_sq, ((0, K_pad - K), (0, 0)), constant_values=1e30)

    patches_spec = pl.BlockSpec((F, tile_n), lambda i: (0, i))
    wenc_spec = pl.BlockSpec((D_pad, F), lambda i: (0, 0))
    benc_spec = pl.BlockSpec((D_pad, 1), lambda i: (0, 0))
    e_spec = pl.BlockSpec((K_pad, D_pad), lambda i: (0, 0))
    esq_spec = pl.BlockSpec((K_pad, 1), lambda i: (0, 0))

    # Explicit scoped-VMEM budget (defaults: 16 MiB v5e / 32 MiB v6e, v7x).
    fb = 4
    resident = (K_pad * D_pad * (2 if codebook else 1) + K_pad * 128
                + D_pad * F + D_pad * 128) * fb
    per_tile = (F * tile_n + (D_pad * tile_n if codebook else tile_n)) * fb
    interm = (k_chunk * tile_n * 3 + D_pad * tile_n * 3 + 8 * tile_n * 4) * fb
    vmem_limit = int(1.5 * (2 * resident + 2 * per_tile + interm))
    vmem_limit = min(max(vmem_limit, 32 * 1024 * 1024), 64 * 1024 * 1024)
    cparams = pltpu.CompilerParams(dimension_semantics=("parallel",),
                                   vmem_limit_bytes=vmem_limit)

    if not codebook:
        # seq-only kernel: skips the embedding matmul and its HBM writeback.
        seq_flops = 2 * N_pad * D_pad * (F + K_pad)
        seq_bytes = (F * N_pad + D_pad * F + K_pad * D_pad + K_pad + N_pad) * fb
        seq2d = pl.pallas_call(
            functools.partial(_vq_seq_kernel, chunks=chunks),
            out_shape=jax.ShapeDtypeStruct((1, N_pad), jnp.int32),
            grid=(num_tiles,),
            in_specs=[patches_spec, wenc_spec, benc_spec, e_spec, esq_spec],
            out_specs=pl.BlockSpec((1, tile_n), lambda i: (0, i)),
            compiler_params=cparams,
            cost_estimate=pl.CostEstimate(flops=seq_flops, transcendentals=0,
                                          bytes_accessed=seq_bytes),
        )(patches_t, w_enc_t, b_enc_c, e_nat, e_sq_p)
        return seq2d[0, :N].reshape(b, n)

    # transposed codebook for the (D_pad, TILE_N)-major embedding matmul
    e_trn = jnp.pad(e_f.T, ((0, D_pad - d), (0, K_pad - K)))   # (D_pad, K_pad)
    et_spec = pl.BlockSpec((D_pad, K_pad), lambda i: (0, 0))

    emb_flops = 2 * N_pad * D_pad * (F + 2 * K_pad)
    emb_bytes = (F * N_pad + D_pad * F + 2 * K_pad * D_pad + K_pad
                 + D_pad * N_pad) * fb
    embed_t = pl.pallas_call(
        functools.partial(_vq_embed_kernel, chunks=chunks),
        out_shape=jax.ShapeDtypeStruct((D_pad, N_pad), jnp.float32),
        grid=(num_tiles,),
        in_specs=[patches_spec, wenc_spec, benc_spec, e_spec, et_spec, esq_spec],
        out_specs=pl.BlockSpec((D_pad, tile_n), lambda i: (0, i)),
        compiler_params=cparams,
        cost_estimate=pl.CostEstimate(flops=emb_flops, transcendentals=0,
                                      bytes_accessed=emb_bytes),
    )(patches_t, w_enc_t, b_enc_c, e_nat, e_trn, e_sq_p)

    # embed.view(b, h, w, d).permute(0, 3, 1, 2): the kernel already emits the
    # d-major layout, so only the two leading axes move (contiguous h*w rows).
    embed = embed_t[:d, :N].reshape(d, b, h, w).transpose(1, 0, 2, 3)
    return embed


if __name__ == "__main__":
    batch, chans, spatial = 2, 4, 16
    patch = 4                       # -> h = w = 4, n = 16 tokens per image
    num_tokens = 256                # vae.num_tokens (multiple of 128)
    embed_dim = 128                 # codebook dim (lane-aligned)

    key = jax.random.PRNGKey(0)
    k_x, k_w, k_b, k_e = jax.random.split(key, 4)

    x = jax.random.normal(k_x, (batch, chans, spatial, spatial), jnp.float32)
    w_enc = jax.random.normal(
        k_w, (chans * patch * patch, embed_dim), jnp.float32) * 0.1
    b_enc = jax.random.normal(k_b, (1, embed_dim), jnp.float32) * 0.1
    embedding_weight = jax.random.normal(
        k_e, (num_tokens, embed_dim), jnp.float32) * 0.1

    hh = ww = spatial // patch
    n_tok = hh * ww
    feat = chans * patch * patch

    # codebook=True path: (b, d, h, w)
    embed = vqgan_vae_embed(x, w_enc, b_enc, embedding_weight,
                            codebook=True, patch=patch)
    embed = jax.block_until_ready(embed)
    assert embed.shape == (batch, embed_dim, hh, ww)

    # codebook=False path: raw indices (b, n)
    seq = vqgan_vae_embed(x, w_enc, b_enc, embedding_weight,
                          codebook=False, patch=patch)
    seq = jax.block_until_ready(seq)
    assert seq.shape == (batch, n_tok) and seq.dtype == jnp.int32

    # ---- pure-JAX f32 reference (mirrors the module's one_hot @ embedding) ----
    patches_ref_t = (x.reshape(batch, chans, hh, patch, ww, patch)
                      .transpose(1, 3, 5, 0, 2, 4)
                      .reshape(feat, batch * n_tok))
    z_t = jnp.dot(w_enc.T, patches_ref_t) + b_enc.reshape(-1, 1)
    e_sq_ref = jnp.sum(embedding_weight * embedding_weight, axis=1,
                       keepdims=True)
    dist_t = e_sq_ref + jnp.dot(embedding_weight, -2.0 * z_t)
    seq_expect = jnp.argmin(dist_t, axis=0).astype(jnp.int32).reshape(batch,
                                                                      n_tok)
    embed_expect = (embedding_weight[seq_expect.reshape(-1)]
                    .reshape(batch, hh, ww, embed_dim).transpose(0, 3, 1, 2))

    assert jnp.array_equal(seq, seq_expect), "codebook indices mismatch"
    assert jnp.allclose(embed, embed_expect, atol=1e-4, rtol=1e-4), \
        "embed mismatch"

    print("KERNEL_OK")
</pallas_src>

<mosaic_0001>
module attributes {stable_mosaic.version = 11 : i64} {
  func.func @_vq_embed_kernel(%arg0: i32, %arg1: memref<64x128xf32, #tpu.memory_space<vmem>>, %arg2: memref<128x64xf32, #tpu.memory_space<vmem>>, %arg3: memref<128x1xf32, #tpu.memory_space<vmem>>, %arg4: memref<256x128xf32, #tpu.memory_space<vmem>>, %arg5: memref<128x256xf32, #tpu.memory_space<vmem>>, %arg6: memref<256x1xf32, #tpu.memory_space<vmem>>, %arg7: memref<128x128xf32, #tpu.memory_space<vmem>>) attributes {dimension_semantics = [#tpu.dimension_semantics<parallel>], iteration_bounds = array<i64: 1>, scalar_prefetch = 0 : i64, scratch_operands = 0 : i64, tpu.core_type = #tpu.core_type<tc>, window_params = [{transform_indices = @transform_0, window_bounds = array<i64: 64, 128>}, {pipeline_mode = #tpu.pipeline_mode<synchronous>, transform_indices = @transform_1, window_bounds = array<i64: 128, 64>}, {pipeline_mode = #tpu.pipeline_mode<synchronous>, transform_indices = @transform_2, window_bounds = array<i64: 128, 1>}, {pipeline_mode = #tpu.pipeline_mode<synchronous>, transform_indices = @transform_3, window_bounds = array<i64: 256, 128>}, {pipeline_mode = #tpu.pipeline_mode<synchronous>, transform_indices = @transform_4, window_bounds = array<i64: 128, 256>}, {pipeline_mode = #tpu.pipeline_mode<synchronous>, transform_indices = @transform_5, window_bounds = array<i64: 256, 1>}, {transform_indices = @transform_6, window_bounds = array<i64: 128, 128>}]} {
    %c0 = arith.constant 0 : index
    %c0_0 = arith.constant 0 : index
    %0 = vector.load %arg2[%c0, %c0_0] : memref<128x64xf32, #tpu.memory_space<vmem>>, vector<128x64xf32>
    %c0_1 = arith.constant 0 : index
    %c0_2 = arith.constant 0 : index
    %1 = vector.load %arg1[%c0_1, %c0_2] : memref<64x128xf32, #tpu.memory_space<vmem>>, vector<64x128xf32>
    %cst = arith.constant dense<0.000000e+00> : vector<128x128xf32>
    %2 = tpu.matmul %0, %1, %cst {dimension_numbers = #tpu.dot_dimension_numbers<[1], [0], [0], [1], [0, 0, 1, 1], [], []>} : vector<128x64xf32>, vector<64x128xf32>, vector<128x128xf32> -> vector<128x128xf32>
    %c0_3 = arith.constant 0 : index
    %c0_4 = arith.constant 0 : index
    %3 = vector.load %arg3[%c0_3, %c0_4] : memref<128x1xf32, #tpu.memory_space<vmem>>, vector<128x1xf32>
    %4 = vector.broadcast %3 : vector<128x1xf32> to vector<128x128xf32>
    %5 = arith.addf %2, %4 : vector<128x128xf32>
    %cst_5 = arith.constant -2.000000e+00 : f32
    %6 = vector.broadcast %cst_5 : f32 to vector<128x128xf32>
    %7 = arith.mulf %6, %5 : vector<128x128xf32>
    %cst_6 = arith.constant 0x7F800000 : f32
    %8 = vector.broadcast %cst_6 : f32 to vector<8x128xf32>
    %c0_i32 = arith.constant 0 : i32
    %9 = vector.broadcast %c0_i32 : i32 to vector<8x128xi32>
    %c0_7 = arith.constant 0 : index
    %c0_8 = arith.constant 0 : index
    %10 = vector.load %arg4[%c0_7, %c0_8] : memref<256x128xf32, #tpu.memory_space<vmem>>, vector<256x128xf32>
    %c0_9 = arith.constant 0 : index
    %c0_10 = arith.constant 0 : index
    %11 = vector.load %arg6[%c0_9, %c0_10] : memref<256x1xf32, #tpu.memory_space<vmem>>, vector<256x1xf32>
    %cst_11 = arith.constant dense<0.000000e+00> : vector<256x128xf32>
    %12 = tpu.matmul %10, %7, %cst_11 {dimension_numbers = #tpu.dot_dimension_numbers<[1], [0], [0], [1], [0, 0, 1, 1], [], []>} : vector<256x128xf32>, vector<128x128xf32>, vector<256x128xf32> -> vector<256x128xf32>
    %13 = vector.broadcast %11 : vector<256x1xf32> to vector<256x128xf32>
    %14 = arith.addf %13, %12 : vector<256x128xf32>
    %15 = vector.extract_strided_slice %14 {offsets = [0, 0], sizes = [8, 128], strides = [1, 1]} : vector<256x128xf32> to vector<8x128xf32>
    %16 = arith.cmpf olt, %15, %8 : vector<8x128xf32>
    %17 = arith.select %16, %15, %8 : vector<8x128xi1>, vector<8x128xf32>
    %c0_i32_12 = arith.constant 0 : i32
    %18 = vector.broadcast %c0_i32_12 : i32 to vector<8x128xi32>
    %19 = arith.select %16, %18, %9 : vector<8x128xi1>, vector<8x128xi32>
    %20 = vector.extract_strided_slice %14 {offsets = [8, 0], sizes = [8, 128], strides = [1, 1]} : vector<256x128xf32> to vector<8x128xf32>
    %21 = arith.cmpf olt, %20, %17 : vector<8x128xf32>
    %22 = arith.select %21, %20, %17 : vector<8x128xi1>, vector<8x128xf32>
    %c1_i32 = arith.constant 1 : i32
    %23 = vector.broadcast %c1_i32 : i32 to vector<8x128xi32>
    %24 = arith.select %21, %23, %19 : vector<8x128xi1>, vector<8x128xi32>
    %25 = vector.extract_strided_slice %14 {offsets = [16, 0], sizes = [8, 128], strides = [1, 1]} : vector<256x128xf32> to vector<8x128xf32>
    %26 = arith.cmpf olt, %25, %22 : vector<8x128xf32>
    %27 = arith.select %26, %25, %22 : vector<8x128xi1>, vector<8x128xf32>
    %c2_i32 = arith.constant 2 : i32
    %28 = vector.broadcast %c2_i32 : i32 to vector<8x128xi32>
    %29 = arith.select %26, %28, %24 : vector<8x128xi1>, vector<8x128xi32>
    %30 = vector.extract_strided_slice %14 {offsets = [24, 0], sizes = [8, 128], strides = [1, 1]} : vector<256x128xf32> to vector<8x128xf32>
    %31 = arith.cmpf olt, %30, %27 : vector<8x128xf32>
    %32 = arith.select %31, %30, %27 : vector<8x128xi1>, vector<8x128xf32>
    %c3_i32 = arith.constant 3 : i32
    %33 = vector.broadcast %c3_i32 : i32 to vector<8x128xi32>
    %34 = arith.select %31, %33, %29 : vector<8x128xi1>, vector<8x128xi32>
    %35 = vector.extract_strided_slice %14 {offsets = [32, 0], sizes = [8, 128], strides = [1, 1]} : vector<256x128xf32> to vector<8x128xf32>
    %36 = arith.cmpf olt, %35, %32 : vector<8x128xf32>
    %37 = arith.select %36, %35, %32 : vector<8x128xi1>, vector<8x128xf32>
    %c4_i32 = arith.constant 4 : i32
    %38 = vector.broadcast %c4_i32 : i32 to vector<8x128xi32>
    %39 = arith.select %36, %38, %34 : vector<8x128xi1>, vector<8x128xi32>
    %40 = vector.extract_strided_slice %14 {offsets = [40, 0], sizes = [8, 128], strides = [1, 1]} : vector<256x128xf32> to vector<8x128xf32>
    %41 = arith.cmpf olt, %40, %37 : vector<8x128xf32>
    %42 = arith.select %41, %40, %37 : vector<8x128xi1>, vector<8x128xf32>
    %c5_i32 = arith.constant 5 : i32
    %43 = vector.broadcast %c5_i32 : i32 to vector<8x128xi32>
    %44 = arith.select %41, %43, %39 : vector<8x128xi1>, vector<8x128xi32>
    %45 = vector.extract_strided_slice %14 {offsets = [48, 0], sizes = [8, 128], strides = [1, 1]} : vector<256x128xf32> to vector<8x128xf32>
    %46 = arith.cmpf olt, %45, %42 : vector<8x128xf32>
    %47 = arith.select %46, %45, %42 : vector<8x128xi1>, vector<8x128xf32>
    %c6_i32 = arith.constant 6 : i32
    %48 = vector.broadcast %c6_i32 : i32 to vector<8x128xi32>
    %49 = arith.select %46, %48, %44 : vector<8x128xi1>, vector<8x128xi32>
    %50 = vector.extract_strided_slice %14 {offsets = [56, 0], sizes = [8, 128], strides = [1, 1]} : vector<256x128xf32> to vector<8x128xf32>
    %51 = arith.cmpf olt, %50, %47 : vector<8x128xf32>
    %52 = arith.select %51, %50, %47 : vector<8x128xi1>, vector<8x128xf32>
    %c7_i32 = arith.constant 7 : i32
    %53 = vector.broadcast %c7_i32 : i32 to vector<8x128xi32>
    %54 = arith.select %51, %53, %49 : vector<8x128xi1>, vector<8x128xi32>
    %55 = vector.extract_strided_slice %14 {offsets = [64, 0], sizes = [8, 128], strides = [1, 1]} : vector<256x128xf32> to vector<8x128xf32>
    %56 = arith.cmpf olt, %55, %52 : vector<8x128xf32>
    %57 = arith.select %56, %55, %52 : vector<8x128xi1>, vector<8x128xf32>
    %c8_i32 = arith.constant 8 : i32
    %58 = vector.broadcast %c8_i32 : i32 to vector<8x128xi32>
    %59 = arith.select %56, %58, %54 : vector<8x128xi1>, vector<8x128xi32>
    %60 = vector.extract_strided_slice %14 {offsets = [72, 0], sizes = [8, 128], strides = [1, 1]} : vector<256x128xf32> to vector<8x128xf32>
    %61 = arith.cmpf olt, %60, %57 : vector<8x128xf32>
    %62 = arith.select %61, %60, %57 : vector<8x128xi1>, vector<8x128xf32>
    %c9_i32 = arith.constant 9 : i32
    %63 = vector.broadcast %c9_i32 : i32 to vector<8x128xi32>
    %64 = arith.select %61, %63, %59 : vector<8x128xi1>, vector<8x128xi32>
    %65 = vector.extract_strided_slice %14 {offsets = [80, 0], sizes = [8, 128], strides = [1, 1]} : vector<256x128xf32> to vector<8x128xf32>
    %66 = arith.cmpf olt, %65, %62 : vector<8x128xf32>
    %67 = arith.select %66, %65, %62 : vector<8x128xi1>, vector<8x128xf32>
    %c10_i32 = arith.constant 10 : i32
    %68 = vector.broadcast %c10_i32 : i32 to vector<8x128xi32>
    %69 = arith.select %66, %68, %64 : vector<8x128xi1>, vector<8x128xi32>
    %70 = vector.extract_strided_slice %14 {offsets = [88, 0], sizes = [8, 128], strides = [1, 1]} : vector<256x128xf32> to vector<8x128xf32>
    %71 = arith.cmpf olt, %70, %67 : vector<8x128xf32>
    %72 = arith.select %71, %70, %67 : vector<8x128xi1>, vector<8x128xf32>
    %c11_i32 = arith.constant 11 : i32
    %73 = vector.broadcast %c11_i32 : i32 to vector<8x128xi32>
    %74 = arith.select %71, %73, %69 : vector<8x128xi1>, vector<8x128xi32>
    %75 = vector.extract_strided_slice %14 {offsets = [96, 0], sizes = [8, 128], strides = [1, 1]} : vector<256x128xf32> to vector<8x128xf32>
    %76 = arith.cmpf olt, %75, %72 : vector<8x128xf32>
    %77 = arith.select %76, %75, %72 : vector<8x128xi1>, vector<8x128xf32>
    %c12_i32 = arith.constant 12 : i32
    %78 = vector.broadcast %c12_i32 : i32 to vector<8x128xi32>
    %79 = arith.select %76, %78, %74 : vector<8x128xi1>, vector<8x128xi32>
    %80 = vector.extract_strided_slice %14 {offsets = [104, 0], sizes = [8, 128], strides = [1, 1]} : vector<256x128xf32> to vector<8x128xf32>
    %81 = arith.cmpf olt, %80, %77 : vector<8x128xf32>
    %82 = arith.select %81, %80, %77 : vector<8x128xi1>, vector<8x128xf32>
    %c13_i32 = arith.constant 13 : i32
    %83 = vector.broadcast %c13_i32 : i32 to vector<8x128xi32>
    %84 = arith.select %81, %83, %79 : vector<8x128xi1>, vector<8x128xi32>
    %85 = vector.extract_strided_slice %14 {offsets = [112, 0], sizes = [8, 128], strides = [1, 1]} : vector<256x128xf32> to vector<8x128xf32>
    %86 = arith.cmpf olt, %85, %82 : vector<8x128xf32>
    %87 = arith.select %86, %85, %82 : vector<8x128xi1>, vector<8x128xf32>
    %c14_i32 = arith.constant 14 : i32
    %88 = vector.broadcast %c14_i32 : i32 to vector<8x128xi32>
    %89 = arith.select %86, %88, %84 : vector<8x128xi1>, vector<8x128xi32>
    %90 = vector.extract_strided_slice %14 {offsets = [120, 0], sizes = [8, 128], strides = [1, 1]} : vector<256x128xf32> to vector<8x128xf32>
    %91 = arith.cmpf olt, %90, %87 : vector<8x128xf32>
    %92 = arith.select %91, %90, %87 : vector<8x128xi1>, vector<8x128xf32>
    %c15_i32 = arith.constant 15 : i32
    %93 = vector.broadcast %c15_i32 : i32 to vector<8x128xi32>
    %94 = arith.select %91, %93, %89 : vector<8x128xi1>, vector<8x128xi32>
    %95 = vector.extract_strided_slice %14 {offsets = [128, 0], sizes = [8, 128], strides = [1, 1]} : vector<256x128xf32> to vector<8x128xf32>
    %96 = arith.cmpf olt, %95, %92 : vector<8x128xf32>
    %97 = arith.select %96, %95, %92 : vector<8x128xi1>, vector<8x128xf32>
    %c16_i32 = arith.constant 16 : i32
    %98 = vector.broadcast %c16_i32 : i32 to vector<8x128xi32>
    %99 = arith.select %96, %98, %94 : vector<8x128xi1>, vector<8x128xi32>
    %100 = vector.extract_strided_slice %14 {offsets = [136, 0], sizes = [8, 128], strides = [1, 1]} : vector<256x128xf32> to vector<8x128xf32>
    %101 = arith.cmpf olt, %100, %97 : vector<8x128xf32>
    %102 = arith.select %101, %100, %97 : vector<8x128xi1>, vector<8x128xf32>
    %c17_i32 = arith.constant 17 : i32
    %103 = vector.broadcast %c17_i32 : i32 to vector<8x128xi32>
    %104 = arith.select %101, %103, %99 : vector<8x128xi1>, vector<8x128xi32>
    %105 = vector.extract_strided_slice %14 {offsets = [144, 0], sizes = [8, 128], strides = [1, 1]} : vector<256x128xf32> to vector<8x128xf32>
    %106 = arith.cmpf olt, %105, %102 : vector<8x128xf32>
    %107 = arith.select %106, %105, %102 : vector<8x128xi1>, vector<8x128xf32>
    %c18_i32 = arith.constant 18 : i32
    %108 = vector.broadcast %c18_i32 : i32 to vector<8x128xi32>
    %109 = arith.select %106, %108, %104 : vector<8x128xi1>, vector<8x128xi32>
    %110 = vector.extract_strided_slice %14 {offsets = [152, 0], sizes = [8, 128], strides = [1, 1]} : vector<256x128xf32> to vector<8x128xf32>
    %111 = arith.cmpf olt, %110, %107 : vector<8x128xf32>
    %112 = arith.select %111, %110, %107 : vector<8x128xi1>, vector<8x128xf32>
    %c19_i32 = arith.constant 19 : i32
    %113 = vector.broadcast %c19_i32 : i32 to vector<8x128xi32>
    %114 = arith.select %111, %113, %109 : vector<8x128xi1>, vector<8x128xi32>
    %115 = vector.extract_strided_slice %14 {offsets = [160, 0], sizes = [8, 128], strides = [1, 1]} : vector<256x128xf32> to vector<8x128xf32>
    %116 = arith.cmpf olt, %115, %112 : vector<8x128xf32>
    %117 = arith.select %116, %115, %112 : vector<8x128xi1>, vector<8x128xf32>
    %c20_i32 = arith.constant 20 : i32
    %118 = vector.broadcast %c20_i32 : i32 to vector<8x128xi32>
    %119 = arith.select %116, %118, %114 : vector<8x128xi1>, vector<8x128xi32>
    %120 = vector.extract_strided_slice %14 {offsets = [168, 0], sizes = [8, 128], strides = [1, 1]} : vector<256x128xf32> to vector<8x128xf32>
    %121 = arith.cmpf olt, %120, %117 : vector<8x128xf32>
    %122 = arith.select %121, %120, %117 : vector<8x128xi1>, vector<8x128xf32>
    %c21_i32 = arith.constant 21 : i32
    %123 = vector.broadcast %c21_i32 : i32 to vector<8x128xi32>
    %124 = arith.select %121, %123, %119 : vector<8x128xi1>, vector<8x128xi32>
    %125 = vector.extract_strided_slice %14 {offsets = [176, 0], sizes = [8, 128], strides = [1, 1]} : vector<256x128xf32> to vector<8x128xf32>
    %126 = arith.cmpf olt, %125, %122 : vector<8x128xf32>
    %127 = arith.select %126, %125, %122 : vector<8x128xi1>, vector<8x128xf32>
    %c22_i32 = arith.constant 22 : i32
    %128 = vector.broadcast %c22_i32 : i32 to vector<8x128xi32>
    %129 = arith.select %126, %128, %124 : vector<8x128xi1>, vector<8x128xi32>
    %130 = vector.extract_strided_slice %14 {offsets = [184, 0], sizes = [8, 128], strides = [1, 1]} : vector<256x128xf32> to vector<8x128xf32>
    %131 = arith.cmpf olt, %130, %127 : vector<8x128xf32>
    %132 = arith.select %131, %130, %127 : vector<8x128xi1>, vector<8x128xf32>
    %c23_i32 = arith.constant 23 : i32
    %133 = vector.broadcast %c23_i32 : i32 to vector<8x128xi32>
    %134 = arith.select %131, %133, %129 : vector<8x128xi1>, vector<8x128xi32>
    %135 = vector.extract_strided_slice %14 {offsets = [192, 0], sizes = [8, 128], strides = [1, 1]} : vector<256x128xf32> to vector<8x128xf32>
    %136 = arith.cmpf olt, %135, %132 : vector<8x128xf32>
    %137 = arith.select %136, %135, %132 : vector<8x128xi1>, vector<8x128xf32>
    %c24_i32 = arith.constant 24 : i32
    %138 = vector.broadcast %c24_i32 : i32 to vector<8x128xi32>
    %139 = arith.select %136, %138, %134 : vector<8x128xi1>, vector<8x128xi32>
    %140 = vector.extract_strided_slice %14 {offsets = [200, 0], sizes = [8, 128], strides = [1, 1]} : vector<256x128xf32> to vector<8x128xf32>
    %141 = arith.cmpf olt, %140, %137 : vector<8x128xf32>
    %142 = arith.select %141, %140, %137 : vector<8x128xi1>, vector<8x128xf32>
    %c25_i32 = arith.constant 25 : i32
    %143 = vector.broadcast %c25_i32 : i32 to vector<8x128xi32>
    %144 = arith.select %141, %143, %139 : vector<8x128xi1>, vector<8x128xi32>
    %145 = vector.extract_strided_slice %14 {offsets = [208, 0], sizes = [8, 128], strides = [1, 1]} : vector<256x128xf32> to vector<8x128xf32>
    %146 = arith.cmpf olt, %145, %142 : vector<8x128xf32>
    %147 = arith.select %146, %145, %142 : vector<8x128xi1>, vector<8x128xf32>
    %c26_i32 = arith.constant 26 : i32
    %148 = vector.broadcast %c26_i32 : i32 to vector<8x128xi32>
    %149 = arith.select %146, %148, %144 : vector<8x128xi1>, vector<8x128xi32>
    %150 = vector.extract_strided_slice %14 {offsets = [216, 0], sizes = [8, 128], strides = [1, 1]} : vector<256x128xf32> to vector<8x128xf32>
    %151 = arith.cmpf olt, %150, %147 : vector<8x128xf32>
    %152 = arith.select %151, %150, %147 : vector<8x128xi1>, vector<8x128xf32>
    %c27_i32 = arith.constant 27 : i32
    %153 = vector.broadcast %c27_i32 : i32 to vector<8x128xi32>
    %154 = arith.select %151, %153, %149 : vector<8x128xi1>, vector<8x128xi32>
    %155 = vector.extract_strided_slice %14 {offsets = [224, 0], sizes = [8, 128], strides = [1, 1]} : vector<256x128xf32> to vector<8x128xf32>
    %156 = arith.cmpf olt, %155, %152 : vector<8x128xf32>
    %157 = arith.select %156, %155, %152 : vector<8x128xi1>, vector<8x128xf32>
    %c28_i32 = arith.constant 28 : i32
    %158 = vector.broadcast %c28_i32 : i32 to vector<8x128xi32>
    %159 = arith.select %156, %158, %154 : vector<8x128xi1>, vector<8x128xi32>
    %160 = vector.extract_strided_slice %14 {offsets = [232, 0], sizes = [8, 128], strides = [1, 1]} : vector<256x128xf32> to vector<8x128xf32>
    %161 = arith.cmpf olt, %160, %157 : vector<8x128xf32>
    %162 = arith.select %161, %160, %157 : vector<8x128xi1>, vector<8x128xf32>
    %c29_i32 = arith.constant 29 : i32
    %163 = vector.broadcast %c29_i32 : i32 to vector<8x128xi32>
    %164 = arith.select %161, %163, %159 : vector<8x128xi1>, vector<8x128xi32>
    %165 = vector.extract_strided_slice %14 {offsets = [240, 0], sizes = [8, 128], strides = [1, 1]} : vector<256x128xf32> to vector<8x128xf32>
    %166 = arith.cmpf olt, %165, %162 : vector<8x128xf32>
    %167 = arith.select %166, %165, %162 : vector<8x128xi1>, vector<8x128xf32>
    %c30_i32 = arith.constant 30 : i32
    %168 = vector.broadcast %c30_i32 : i32 to vector<8x128xi32>
    %169 = arith.select %166, %168, %164 : vector<8x128xi1>, vector<8x128xi32>
    %170 = vector.extract_strided_slice %14 {offsets = [248, 0], sizes = [8, 128], strides = [1, 1]} : vector<256x128xf32> to vector<8x128xf32>
    %171 = arith.cmpf olt, %170, %167 : vector<8x128xf32>
    %172 = arith.select %171, %170, %167 : vector<8x128xi1>, vector<8x128xf32>
    %c31_i32 = arith.constant 31 : i32
    %173 = vector.broadcast %c31_i32 : i32 to vector<8x128xi32>
    %174 = arith.select %171, %173, %169 : vector<8x128xi1>, vector<8x128xi32>
    %175 = tpu.iota {dimensions = array<i32: 0>} : vector<8x128xi32>
    %c8_i32_13 = arith.constant 8 : i32
    %176 = vector.broadcast %c8_i32_13 : i32 to vector<8x128xi32>
    %177 = arith.muli %174, %176 : vector<8x128xi32>
    %178 = arith.addi %177, %175 : vector<8x128xi32>
    %cst_14 = arith.constant dense<0x7F800000> : vector<128xf32>
    %179 = vector.multi_reduction <minimumf>, %172, %cst_14 [0] : vector<8x128xf32> to vector<128xf32>
    %180 = vector.shape_cast %179 : vector<128xf32> to vector<1x128xf32>
    %181 = vector.broadcast %180 : vector<1x128xf32> to vector<8x128xf32>
    %182 = arith.cmpf oeq, %172, %181 : vector<8x128xf32>
    %c1073741824_i32 = arith.constant 1073741824 : i32
    %183 = vector.broadcast %c1073741824_i32 : i32 to vector<8x128xi32>
    %184 = arith.select %182, %178, %183 : vector<8x128xi1>, vector<8x128xi32>
    %cst_15 = arith.constant dense<2147483647> : vector<128xi32>
    %185 = vector.multi_reduction <minsi>, %184, %cst_15 [0] : vector<8x128xi32> to vector<128xi32>
    %186 = vector.shape_cast %185 : vector<128xi32> to vector<1x128xi32>
    %187 = tpu.iota {dimensions = array<i32: 0>} : vector<256x128xi32>
    %cst_16 = arith.constant 0.000000e+00 : f32
    %188 = vector.broadcast %cst_16 : f32 to vector<128x128xf32>
    %c0_i32_17 = arith.constant 0 : i32
    %189 = vector.broadcast %c0_i32_17 : i32 to vector<1x128xi32>
    %190 = arith.subi %186, %189 : vector<1x128xi32>
    %191 = vector.broadcast %190 : vector<1x128xi32> to vector<256x128xi32>
    %192 = arith.cmpi eq, %187, %191 : vector<256x128xi32>
    %193 = arith.extui %192 : vector<256x128xi1> to vector<256x128xi32>
    %194 = arith.sitofp %193 : vector<256x128xi32> to vector<256x128xf32>
    %c0_18 = arith.constant 0 : index
    %c0_19 = arith.constant 0 : index
    %195 = vector.load %arg5[%c0_18, %c0_19] : memref<128x256xf32, #tpu.memory_space<vmem>>, vector<128x256xf32>
    %cst_20 = arith.constant dense<0.000000e+00> : vector<128x128xf32>
    %196 = tpu.matmul %195, %194, %cst_20 {dimension_numbers = #tpu.dot_dimension_numbers<[1], [0], [0], [1], [0, 0, 1, 1], [], []>} : vector<128x256xf32>, vector<256x128xf32>, vector<128x128xf32> -> vector<128x128xf32>
    %197 = arith.addf %188, %196 : vector<128x128xf32>
    %c0_21 = arith.constant 0 : index
    %c0_22 = arith.constant 0 : index
    %198 = vector.load %arg7[%c0_21, %c0_22] : memref<128x128xf32, #tpu.memory_space<vmem>>, vector<128x128xf32>
    tpu.vector_store %arg7[%c0_21, %c0_22], %197 {strides = array<i32>} : memref<128x128xf32, #tpu.memory_space<vmem>>, vector<128x128xf32>,
    return
  }
  func.func @transform_0(%arg0: i32) -> (i32, i32) {
    %c0_i32 = arith.constant 0 : i32
    %c0_i32_0 = arith.constant 0 : i32
    return %c0_i32, %arg0 : i32, i32
  }
  func.func @transform_1(%arg0: i32) -> (i32, i32) {
    %c0_i32 = arith.constant 0 : i32
    %c0_i32_0 = arith.constant 0 : i32
    %c0_i32_1 = arith.constant 0 : i32
    return %c0_i32, %c0_i32_0 : i32, i32
  }
  func.func @transform_2(%arg0: i32) -> (i32, i32) {
    %c0_i32 = arith.constant 0 : i32
    %c0_i32_0 = arith.constant 0 : i32
    %c0_i32_1 = arith.constant 0 : i32
    return %c0_i32, %c0_i32_0 : i32, i32
  }
  func.func @transform_3(%arg0: i32) -> (i32, i32) {
    %c0_i32 = arith.constant 0 : i32
    %c0_i32_0 = arith.constant 0 : i32
    %c0_i32_1 = arith.constant 0 : i32
    return %c0_i32, %c0_i32_0 : i32, i32
  }
  func.func @transform_4(%arg0: i32) -> (i32, i32) {
    %c0_i32 = arith.constant 0 : i32
    %c0_i32_0 = arith.constant 0 : i32
    %c0_i32_1 = arith.constant 0 : i32
    return %c0_i32, %c0_i32_0 : i32, i32
  }
  func.func @transform_5(%arg0: i32) -> (i32, i32) {
    %c0_i32 = arith.constant 0 : i32
    %c0_i32_0 = arith.constant 0 : i32
    %c0_i32_1 = arith.constant 0 : i32
    return %c0_i32, %c0_i32_0 : i32, i32
  }
  func.func @transform_6(%arg0: i32) -> (i32, i32) {
    %c0_i32 = arith.constant 0 : i32
    %c0_i32_0 = arith.constant 0 : i32
    return %c0_i32, %arg0 : i32, i32
  }
}

</mosaic_0001>

<llo_original>
// kernel: vqgan_vae_embed.1
$region0: #{vqgan_vae_embed.1}
  #allocation0 [shape = 'u32[]', space=smem, size = 0x4, offset = 0x4, fixed_abs, tag = 'smem constant byte address 0x4 - core index']
  #allocation1 [shape = 'u32[144,128]{1,0:T(1,128)}', space=vmem, size = 0x12000, scoped, tag = 'internal scratch']
  %s0 = inlined_call_operand.vmem [shape: f32[64,128], index: 0, kind: input, shape index: {}]
  %s1 = inlined_call_operand.vmem [shape: f32[128,64], index: 1, kind: input, shape index: {}]
  %s2 = inlined_call_operand.vmem [shape: f32[128,1], index: 2, kind: input, shape index: {}]
  %s3 = inlined_call_operand.vmem [shape: f32[256,128], index: 3, kind: input, shape index: {}]
  %s4 = inlined_call_operand.vmem [shape: f32[128,256], index: 4, kind: input, shape index: {}]
  %s5 = inlined_call_operand.vmem [shape: f32[256,1], index: 5, kind: input, shape index: {}]
  %s6 = inlined_call_operand.vmem [shape: f32[128,128], index: 6, kind: output, shape index: {}]
  %s7 = sld [smem:[#allocation0]]
  $region34: #{vqgan_vae_embed.1} parent=0
    _
  %s9 = ssub.s32 1, %s7
  %s10 = scalar_select 0, %s9, %s7
  // Predicated region
  $region2: #{vqgan_vae_embed.1} parent=0 // pred_check
    _
  $region3: #{vqgan_vae_embed.1} parent=0 // pred_check_branch
    %12 = sbr.rel (0) target = $region5
  $region4: #{vqgan_vae_embed.1} parent=0 // pred_region
    _
  $region5: #{vqgan_vae_embed.1} parent=0 // pred_fallthru
    _
  // Predicated region
  $region6: #{vqgan_vae_embed.1} parent=0 // pred_check
    _
  $region7: #{vqgan_vae_embed.1} parent=0 // pred_check_branch
    %14 = sbr.rel (0) target = $region9
  $region8: #{vqgan_vae_embed.1} parent=0 // pred_region
    _
  $region9: #{vqgan_vae_embed.1} parent=0 // pred_fallthru
    _
  // Predicated region
  $region10: #{vqgan_vae_embed.1} parent=0 // pred_check
    _
  $region11: #{vqgan_vae_embed.1} parent=0 // pred_check_branch
    %16 = sbr.rel (0) target = $region13
  $region12: #{vqgan_vae_embed.1} parent=0 // pred_region
    _
  $region13: #{vqgan_vae_embed.1} parent=0 // pred_fallthru
    _
  // Predicated region
  $region14: #{vqgan_vae_embed.1} parent=0 // pred_check
    _
  $region15: #{vqgan_vae_embed.1} parent=0 // pred_check_branch
    %18 = sbr.rel (0) target = $region17
  $region16: #{vqgan_vae_embed.1} parent=0 // pred_region
    _
  $region17: #{vqgan_vae_embed.1} parent=0 // pred_fallthru
    _
  // Predicated region
  $region18: #{vqgan_vae_embed.1} parent=0 // pred_check
    _
  $region19: #{vqgan_vae_embed.1} parent=0 // pred_check_branch
    %20 = sbr.rel (0) target = $region21
  $region20: #{vqgan_vae_embed.1} parent=0 // pred_region
    _
  $region21: #{vqgan_vae_embed.1} parent=0 // pred_fallthru
    _
  // Predicated region
  $region22: #{vqgan_vae_embed.1} parent=0 // pred_check
    _
  $region23: #{vqgan_vae_embed.1} parent=0 // pred_check_branch
    %22 = sbr.rel (0) target = $region25
  $region24: #{vqgan_vae_embed.1} parent=0 // pred_region
    _
  $region25: #{vqgan_vae_embed.1} parent=0 // pred_fallthru
    _
  %v23 = vld [vmem:[%s1] sm:$0xff]
  %v24 = vld [vmem:[%s1 + $0x8] sm:$0xff]
  %v25 = vld [vmem:[%s1 + $0x10] sm:$0xff]
  %v26 = vld [vmem:[%s1 + $0x18] sm:$0xff]
  %v27 = vld [vmem:[%s1 + $0x20] sm:$0xff]
  %v28 = vld [vmem:[%s1 + $0x28] sm:$0xff]
  %v29 = vld [vmem:[%s1 + $0x30] sm:$0xff]
  %v30 = vld [vmem:[%s1 + $0x38] sm:$0xff]
  %v31 = vld [vmem:[%s1 + $0x40] sm:$0xff]
  %v32 = vld [vmem:[%s1 + $0x48] sm:$0xff]
  %v33 = vld [vmem:[%s1 + $0x50] sm:$0xff]
  %v34 = vld [vmem:[%s1 + $0x58] sm:$0xff]
  %v35 = vld [vmem:[%s1 + $0x60] sm:$0xff]
  %v36 = vld [vmem:[%s1 + $0x68] sm:$0xff]
  %v37 = vld [vmem:[%s1 + $0x70] sm:$0xff]
  %v38 = vld [vmem:[%s1 + $0x78] sm:$0xff]
  %v39 = vld [vmem:[%s0] sm:$0xff]
  %v40 = vld [vmem:[%s0 + $0x8] sm:$0xff]
  %v41 = vld [vmem:[%s0 + $0x10] sm:$0xff]
  %v42 = vld [vmem:[%s0 + $0x18] sm:$0xff]
  %v43 = vld [vmem:[%s0 + $0x20] sm:$0xff]
  %v44 = vld [vmem:[%s0 + $0x28] sm:$0xff]
  %v45 = vld [vmem:[%s0 + $0x30] sm:$0xff]
  %v46 = vld [vmem:[%s0 + $0x38] sm:$0xff]
  %v47 = vld [vmem:[%s2] sm:$0xff]
  %v48 = vld [vmem:[%s2 + $0x8] sm:$0xff]
  %v49 = vld [vmem:[%s2 + $0x10] sm:$0xff]
  %v50 = vld [vmem:[%s2 + $0x18] sm:$0xff]
  %v51 = vld [vmem:[%s2 + $0x20] sm:$0xff]
  %v52 = vld [vmem:[%s2 + $0x28] sm:$0xff]
  %v53 = vld [vmem:[%s2 + $0x30] sm:$0xff]
  %v54 = vld [vmem:[%s2 + $0x38] sm:$0xff]
  %v55 = vld [vmem:[%s2 + $0x40] sm:$0xff]
  %v56 = vld [vmem:[%s2 + $0x48] sm:$0xff]
  %v57 = vld [vmem:[%s2 + $0x50] sm:$0xff]
  %v58 = vld [vmem:[%s2 + $0x58] sm:$0xff]
  %v59 = vld [vmem:[%s2 + $0x60] sm:$0xff]
  %v60 = vld [vmem:[%s2 + $0x68] sm:$0xff]
  %v61 = vld [vmem:[%s2 + $0x70] sm:$0xff]
  %v62 = vld [vmem:[%s2 + $0x78] sm:$0xff]
  %64 = vset.pattern.permute.xlu0 0
  %65 = vperm.xlu0 %64, %v47
  %v66 = vpop.permute.xlu0 %65
  %69 = vset.pattern.permute.xlu0 0
  %70 = vperm.xlu0 %69, %v48
  %v71 = vpop.permute.xlu0 %70
  %74 = vset.pattern.permute.xlu0 0
  %75 = vperm.xlu0 %74, %v49
  %v76 = vpop.permute.xlu0 %75
  %79 = vset.pattern.permute.xlu0 0
  %80 = vperm.xlu0 %79, %v50
  %v81 = vpop.permute.xlu0 %80
  %84 = vset.pattern.permute.xlu0 0
  %85 = vperm.xlu0 %84, %v51
  %v86 = vpop.permute.xlu0 %85
  %89 = vset.pattern.permute.xlu0 0
  %90 = vperm.xlu0 %89, %v52
  %v91 = vpop.permute.xlu0 %90
  %94 = vset.pattern.permute.xlu0 0
  %95 = vperm.xlu0 %94, %v53
  %v96 = vpop.permute.xlu0 %95
  %99 = vset.pattern.permute.xlu0 0
  %100 = vperm.xlu0 %99, %v54
  %v101 = vpop.permute.xlu0 %100
  %104 = vset.pattern.permute.xlu0 0
  %105 = vperm.xlu0 %104, %v55
  %v106 = vpop.permute.xlu0 %105
  %109 = vset.pattern.permute.xlu0 0
  %110 = vperm.xlu0 %109, %v56
  %v111 = vpop.permute.xlu0 %110
  %114 = vset.pattern.permute.xlu0 0
  %115 = vperm.xlu0 %114, %v57
  %v116 = vpop.permute.xlu0 %115
  %119 = vset.pattern.permute.xlu0 0
  %120 = vperm.xlu0 %119, %v58
  %v121 = vpop.permute.xlu0 %120
  %124 = vset.pattern.permute.xlu0 0
  %125 = vperm.xlu0 %124, %v59
  %v126 = vpop.permute.xlu0 %125
  %129 = vset.pattern.permute.xlu0 0
  %130 = vperm.xlu0 %129, %v60
  %v131 = vpop.permute.xlu0 %130
  %134 = vset.pattern.permute.xlu0 0
  %135 = vperm.xlu0 %134, %v61
  %v136 = vpop.permute.xlu0 %135
  %139 = vset.pattern.permute.xlu0 0
  %140 = vperm.xlu0 %139, %v62
  %v141 = vpop.permute.xlu0 %140
  %vm143 = vcmask 523264
  %v145 = vsel %vm143, %v23, 0
  %v148 = vsel %vm143, %v24, 0
  %v151 = vsel %vm143, %v25, 0
  %v154 = vsel %vm143, %v26, 0
  %v157 = vsel %vm143, %v27, 0
  %v160 = vsel %vm143, %v28, 0
  %v163 = vsel %vm143, %v29, 0
  %v166 = vsel %vm143, %v30, 0
  %v169 = vsel %vm143, %v31, 0
  %v172 = vsel %vm143, %v32, 0
  %v175 = vsel %vm143, %v33, 0
  %v178 = vsel %vm143, %v34, 0
  %v181 = vsel %vm143, %v35, 0
  %v184 = vsel %vm143, %v36, 0
  %v187 = vsel %vm143, %v37, 0
  %v190 = vsel %vm143, %v38, 0
  %192 = vmatprep.subr.mxu0 0.0
  %193 = vmatpush1.msra.mxu0 %v39
  %194 = vmatprep.subr.mxu0 0.0
  %195 = vmatpush1.msra.mxu0 %v40
  %196 = vmatprep.subr.mxu0 0.0
  %197 = vmatpush1.msra.mxu0 %v41
  %198 = vmatprep.subr.mxu0 0.0
  %199 = vmatpush1.msra.mxu0 %v42
  %200 = vmatprep.subr.mxu0 0.0
  %201 = vmatpush1.msra.mxu0 %v43
  %202 = vmatprep.subr.mxu0 0.0
  %203 = vmatpush1.msra.mxu0 %v44
  %204 = vmatprep.subr.mxu0 0.0
  %205 = vmatpush1.msra.mxu0 %v45
  %206 = vmatprep.subr.mxu0 0.0
  %207 = vmatpush1.msra.mxu0 %v46
  %208 = vmatprep.subr.mxu0 0.0
  %209 = vmatpush1.msra.mxu0 0.0
  %210 = vmatprep.subr.mxu0 0.0
  %211 = vmatpush1.msra.mxu0 0.0
  %212 = vmatprep.subr.mxu0 0.0
  %213 = vmatpush1.msra.mxu0 0.0
  %214 = vmatprep.subr.mxu0 0.0
  %215 = vmatpush1.msra.mxu0 0.0
  %216 = vmatprep.subr.mxu0 0.0
  %217 = vmatpush1.msra.mxu0 0.0
  %218 = vmatprep.subr.mxu0 0.0
  %219 = vmatpush1.msra.mxu0 0.0
  %220 = vmatprep.subr.mxu0 0.0
  %221 = vmatpush1.msra.mxu0 0.0
  %222 = vmatprep.subr.mxu0 0.0
  %223 = vmatpush1.msra.mxu0 0.0
  %224 = vmatprep.subr.mxu0 0.0
  %225 = vmatpush1.msra.mxu0 0.0
  %226 = vmatprep.subr.mxu0 0.0
  %227 = vmatpush1.msra.mxu0 0.0
  %228 = vmatprep.subr.mxu0 0.0
  %229 = vmatpush1.msra.mxu0 0.0
  %230 = vmatprep.subr.mxu0 0.0
  %231 = vmatpush1.msra.mxu0 0.0
  %232 = vmatprep.subr.mxu0 0.0
  %233 = vmatpush1.msra.mxu0 0.0
  %234 = vmatprep.subr.mxu0 0.0
  %235 = vmatpush1.msra.mxu0 0.0
  %236 = vmatprep.subr.mxu0 0.0
  %237 = vmatpush1.msra.mxu0 0.0
  %238 = vmatprep.subr.mxu0 0.0
  %239 = vmatpush1.msra.mxu0 0.0
  %240 = vmatprep.subr.mxu0 0.0
  %241 = vmatpush1.msra.mxu0 0.0
  %242 = vmatprep.subr.mxu0 0.0
  %243 = vmatpush1.msra.mxu0 0.0
  %244 = vmatprep.subr.mxu0 0.0
  %245 = vmatpush1.msra.mxu0 0.0
  %246 = vmatprep.subr.mxu0 0.0
  %247 = vmatpush1.msra.mxu0 0.0
  %248 = vmatprep.subr.mxu0 0.0
  %249 = vmatpush1.msra.mxu0 0.0
  %250 = vmatprep.subr.mxu0 0.0
  %251 = vmatpush1.msra.mxu0 0.0
  %252 = vmatprep.subr.mxu0 0.0
  %253 = vmatpush1.msra.mxu0 0.0
  %254 = vmatprep.subr.mxu0 0.0
  %255 = vmatpush1.msra.mxu0 0.0
  %256 = vmatprep.mubr.f32.mxu0 0.0
  %257 = vmatmul.mubr.f32.gmra.mrb[0].mxu0 %v145
  %v258 = vpop.f32.mrb[0].mxu0
  %v259 = vadd.f32 %v66, %v258
  %v260 = vpop.f32.mrb[0].mxu0
  %261 = vmatprep.mubr.f32.mxu0 0.0
  %262 = vmatmul.mubr.f32.gmra.mrb[0].mxu0 %v148
  %v263 = vpop.f32.mrb[0].mxu0
  %v264 = vadd.f32 %v71, %v263
  %v265 = vpop.f32.mrb[0].mxu0
  %266 = vmatprep.mubr.f32.mxu0 0.0
  %267 = vmatmul.mubr.f32.gmra.mrb[0].mxu0 %v151
  %v268 = vpop.f32.mrb[0].mxu0
  %v269 = vadd.f32 %v76, %v268
  %v270 = vpop.f32.mrb[0].mxu0
  %271 = vmatprep.mubr.f32.mxu0 0.0
  %272 = vmatmul.mubr.f32.gmra.mrb[0].mxu0 %v154
  %v273 = vpop.f32.mrb[0].mxu0
  %v274 = vadd.f32 %v81, %v273
  %v275 = vpop.f32.mrb[0].mxu0
  %276 = vmatprep.mubr.f32.mxu0 0.0
  %277 = vmatmul.mubr.f32.gmra.mrb[0].mxu0 %v157
  %v278 = vpop.f32.mrb[0].mxu0
  %v279 = vadd.f32 %v86, %v278
  %v280 = vpop.f32.mrb[0].mxu0
  %281 = vmatprep.mubr.f32.mxu0 0.0
  %282 = vmatmul.mubr.f32.gmra.mrb[0].mxu0 %v160
  %v283 = vpop.f32.mrb[0].mxu0
  %v284 = vadd.f32 %v91, %v283
  %v285 = vpop.f32.mrb[0].mxu0
  %286 = vmatprep.mubr.f32.mxu0 0.0
  %287 = vmatmul.mubr.f32.gmra.mrb[0].mxu0 %v163
  %v288 = vpop.f32.mrb[0].mxu0
  %v289 = vadd.f32 %v96, %v288
  %v290 = vpop.f32.mrb[0].mxu0
  %291 = vmatprep.mubr.f32.mxu0 0.0
  %292 = vmatmul.mubr.f32.gmra.mrb[0].mxu0 %v166
  %v293 = vpop.f32.mrb[0].mxu0
  %v294 = vadd.f32 %v101, %v293
  %v295 = vpop.f32.mrb[0].mxu0
  %296 = vmatprep.mubr.f32.mxu0 0.0
  %297 = vmatmul.mubr.f32.gmra.mrb[0].mxu0 %v169
  %v298 = vpop.f32.mrb[0].mxu0
  %v299 = vadd.f32 %v106, %v298
  %v300 = vpop.f32.mrb[0].mxu0
  %301 = vmatprep.mubr.f32.mxu0 0.0
  %302 = vmatmul.mubr.f32.gmra.mrb[0].mxu0 %v172
  %v303 = vpop.f32.mrb[0].mxu0
  %v304 = vadd.f32 %v111, %v303
  %v305 = vpop.f32.mrb[0].mxu0
  %306 = vmatprep.mubr.f32.mxu0 0.0
  %307 = vmatmul.mubr.f32.gmra.mrb[0].mxu0 %v175
  %v308 = vpop.f32.mrb[0].mxu0
  %v309 = vadd.f32 %v116, %v308
  %v310 = vpop.f32.mrb[0].mxu0
  %311 = vmatprep.mubr.f32.mxu0 0.0
  %312 = vmatmul.mubr.f32.gmra.mrb[0].mxu0 %v178
  %v313 = vpop.f32.mrb[0].mxu0
  %v314 = vadd.f32 %v121, %v313
  %v315 = vpop.f32.mrb[0].mxu0
  %316 = vmatprep.mubr.f32.mxu0 0.0
  %317 = vmatmul.mubr.f32.gmra.mrb[0].mxu0 %v181
  %v318 = vpop.f32.mrb[0].mxu0
  %v319 = vadd.f32 %v126, %v318
  %v320 = vpop.f32.mrb[0].mxu0
  %321 = vmatprep.mubr.f32.mxu0 0.0
  %322 = vmatmul.mubr.f32.gmra.mrb[0].mxu0 %v184
  %v323 = vpop.f32.mrb[0].mxu0
  %v324 = vadd.f32 %v131, %v323
  %v325 = vpop.f32.mrb[0].mxu0
  %326 = vmatprep.mubr.f32.mxu0 0.0
  %327 = vmatmul.mubr.f32.gmra.mrb[0].mxu0 %v187
  %v328 = vpop.f32.mrb[0].mxu0
  %v329 = vadd.f32 %v136, %v328
  %v330 = vpop.f32.mrb[0].mxu0
  %331 = vmatprep.mubr.f32.mxu0 0.0
  %332 = vmatmul.mubr.f32.gmra.mrb[0].mxu0 %v190
  %v333 = vpop.f32.mrb[0].mxu0
  %v334 = vadd.f32 %v141, %v333
  %v335 = vpop.f32.mrb[0].mxu0
  %336 = vdwg.mxu0
  %v337 = vmul.f32 %v259, -2.0
  %v338 = vmul.f32 %v264, -2.0
  %v339 = vmul.f32 %v269, -2.0
  %v340 = vmul.f32 %v274, -2.0
  %v341 = vmul.f32 %v279, -2.0
  %v342 = vmul.f32 %v284, -2.0
  %v343 = vmul.f32 %v289, -2.0
  %v344 = vmul.f32 %v294, -2.0
  %v345 = vmul.f32 %v299, -2.0
  %v346 = vmul.f32 %v304, -2.0
  %v347 = vmul.f32 %v309, -2.0
  %v348 = vmul.f32 %v314, -2.0
  %v349 = vmul.f32 %v319, -2.0
  %v350 = vmul.f32 %v324, -2.0
  %v351 = vmul.f32 %v329, -2.0
  %v352 = vmul.f32 %v334, -2.0
  %v353 = vld [vmem:[%s3] sm:$0xff]
  %v354 = vld [vmem:[%s3 + $0x8] sm:$0xff]
  %v355 = vld [vmem:[%s3 + $0x10] sm:$0xff]
  %v356 = vld [vmem:[%s3 + $0x18] sm:$0xff]
  %v357 = vld [vmem:[%s3 + $0x20] sm:$0xff]
  %v358 = vld [vmem:[%s3 + $0x28] sm:$0xff]
  %v359 = vld [vmem:[%s3 + $0x30] sm:$0xff]
  %v360 = vld [vmem:[%s3 + $0x38] sm:$0xff]
  %v361 = vld [vmem:[%s3 + $0x40] sm:$0xff]
  %v362 = vld [vmem:[%s3 + $0x48] sm:$0xff]
  %v363 = vld [vmem:[%s3 + $0x50] sm:$0xff]
  %v364 = vld [vmem:[%s3 + $0x58] sm:$0xff]
  %v365 = vld [vmem:[%s3 + $0x60] sm:$0xff]
  %v366 = vld [vmem:[%s3 + $0x68] sm:$0xff]
  %v367 = vld [vmem:[%s3 + $0x70] sm:$0xff]
  %v368 = vld [vmem:[%s3 + $0x78] sm:$0xff]
  %v369 = vld [vmem:[%s3 + $0x80] sm:$0xff]
  %v370 = vld [vmem:[%s3 + $0x88] sm:$0xff]
  %v371 = vld [vmem:[%s3 + $0x90] sm:$0xff]
  %v372 = vld [vmem:[%s3 + $0x98] sm:$0xff]
  %v373 = vld [vmem:[%s3 + $0xa0] sm:$0xff]
  %v374 = vld [vmem:[%s3 + $0xa8] sm:$0xff]
  %v375 = vld [vmem:[%s3 + $0xb0] sm:$0xff]
  %v376 = vld [vmem:[%s3 + $0xb8] sm:$0xff]
  %v377 = vld [vmem:[%s3 + $0xc0] sm:$0xff]
  %v378 = vld [vmem:[%s3 + $0xc8] sm:$0xff]
  %v379 = vld [vmem:[%s3 + $0xd0] sm:$0xff]
  %v380 = vld [vmem:[%s3 + $0xd8] sm:$0xff]
  %v381 = vld [vmem:[%s3 + $0xe0] sm:$0xff]
  %v382 = vld [vmem:[%s3 + $0xe8] sm:$0xff]
  %v383 = vld [vmem:[%s3 + $0xf0] sm:$0xff]
  %v384 = vld [vmem:[%s3 + $0xf8] sm:$0xff]
  %v385 = vld [vmem:[%s5] sm:$0xff]
  %v386 = vld [vmem:[%s5 + $0x8] sm:$0xff]
  %v387 = vld [vmem:[%s5 + $0x10] sm:$0xff]
  %v388 = vld [vmem:[%s5 + $0x18] sm:$0xff]
  %v389 = vld [vmem:[%s5 + $0x20] sm:$0xff]
  %v390 = vld [vmem:[%s5 + $0x28] sm:$0xff]
  %v391 = vld [vmem:[%s5 + $0x30] sm:$0xff]
  %v392 = vld [vmem:[%s5 + $0x38] sm:$0xff]
  %v393 = vld [vmem:[%s5 + $0x40] sm:$0xff]
  %v394 = vld [vmem:[%s5 + $0x48] sm:$0xff]
  %v395 = vld [vmem:[%s5 + $0x50] sm:$0xff]
  %v396 = vld [vmem:[%s5 + $0x58] sm:$0xff]
  %v397 = vld [vmem:[%s5 + $0x60] sm:$0xff]
  %v398 = vld [vmem:[%s5 + $0x68] sm:$0xff]
  %v399 = vld [vmem:[%s5 + $0x70] sm:$0xff]
  %v400 = vld [vmem:[%s5 + $0x78] sm:$0xff]
  %v401 = vld [vmem:[%s5 + $0x80] sm:$0xff]
  %v402 = vld [vmem:[%s5 + $0x88] sm:$0xff]
  %v403 = vld [vmem:[%s5 + $0x90] sm:$0xff]
  %v404 = vld [vmem:[%s5 + $0x98] sm:$0xff]
  %v405 = vld [vmem:[%s5 + $0xa0] sm:$0xff]
  %v406 = vld [vmem:[%s5 + $0xa8] sm:$0xff]
  %v407 = vld [vmem:[%s5 + $0xb0] sm:$0xff]
  %v408 = vld [vmem:[%s5 + $0xb8] sm:$0xff]
  %v409 = vld [vmem:[%s5 + $0xc0] sm:$0xff]
  %v410 = vld [vmem:[%s5 + $0xc8] sm:$0xff]
  %v411 = vld [vmem:[%s5 + $0xd0] sm:$0xff]
  %v412 = vld [vmem:[%s5 + $0xd8] sm:$0xff]
  %v413 = vld [vmem:[%s5 + $0xe0] sm:$0xff]
  %v414 = vld [vmem:[%s5 + $0xe8] sm:$0xff]
  %v415 = vld [vmem:[%s5 + $0xf0] sm:$0xff]
  %v416 = vld [vmem:[%s5 + $0xf8] sm:$0xff]
  %417 = vmatprep.subr.mxu0 0.0
  %418 = vmatpush1.msra.mxu0 %v337
  %419 = vmatprep.subr.mxu0 0.0
  %420 = vmatpush1.msra.mxu0 %v338
  %421 = vmatprep.subr.mxu0 0.0
  %422 = vmatpush1.msra.mxu0 %v339
  %423 = vmatprep.subr.mxu0 0.0
  %424 = vmatpush1.msra.mxu0 %v340
  %425 = vmatprep.subr.mxu0 0.0
  %426 = vmatpush1.msra.mxu0 %v341
  %427 = vmatprep.subr.mxu0 0.0
  %428 = vmatpush1.msra.mxu0 %v342
  %429 = vmatprep.subr.mxu0 0.0
  %430 = vmatpush1.msra.mxu0 %v343
  %431 = vmatprep.subr.mxu0 0.0
  %432 = vmatpush1.msra.mxu0 %v344
  %433 = vmatprep.subr.mxu0 0.0
  %434 = vmatpush1.msra.mxu0 %v345
  %435 = vmatprep.subr.mxu0 0.0
  %436 = vmatpush1.msra.mxu0 %v346
  %437 = vmatprep.subr.mxu0 0.0
  %438 = vmatpush1.msra.mxu0 %v347
  %439 = vmatprep.subr.mxu0 0.0
  %440 = vmatpush1.msra.mxu0 %v348
  %441 = vmatprep.subr.mxu0 0.0
  %442 = vmatpush1.msra.mxu0 %v349
  %443 = vmatprep.subr.mxu0 0.0
  %444 = vmatpush1.msra.mxu0 %v350
  %445 = vmatprep.subr.mxu0 0.0
  %446 = vmatpush1.msra.mxu0 %v351
  %447 = vmatprep.subr.mxu0 0.0
  %448 = vmatpush1.msra.mxu0 %v352
  %449 = vmatprep.subr.mxu0 0.0
  %450 = vmatpush1.msra.mxu0 0.0
  %451 = vmatprep.subr.mxu0 0.0
  %452 = vmatpush1.msra.mxu0 0.0
  %453 = vmatprep.subr.mxu0 0.0
  %454 = vmatpush1.msra.mxu0 0.0
  %455 = vmatprep.subr.mxu0 0.0
  %456 = vmatpush1.msra.mxu0 0.0
  %457 = vmatprep.subr.mxu0 0.0
  %458 = vmatpush1.msra.mxu0 0.0
  %459 = vmatprep.subr.mxu0 0.0
  %460 = vmatpush1.msra.mxu0 0.0
  %461 = vmatprep.subr.mxu0 0.0
  %462 = vmatpush1.msra.mxu0 0.0
  %463 = vmatprep.subr.mxu0 0.0
  %464 = vmatpush1.msra.mxu0 0.0
  %465 = vmatprep.subr.mxu0 0.0
  %466 = vmatpush1.msra.mxu0 0.0
  %467 = vmatprep.subr.mxu0 0.0
  %468 = vmatpush1.msra.mxu0 0.0
  %469 = vmatprep.subr.mxu0 0.0
  %470 = vmatpush1.msra.mxu0 0.0
  %471 = vmatprep.subr.mxu0 0.0
  %472 = vmatpush1.msra.mxu0 0.0
  %473 = vmatprep.subr.mxu0 0.0
  %474 = vmatpush1.msra.mxu0 0.0
  %475 = vmatprep.subr.mxu0 0.0
  %476 = vmatpush1.msra.mxu0 0.0
  %477 = vmatprep.subr.mxu0 0.0
  %478 = vmatpush1.msra.mxu0 0.0
  %479 = vmatprep.subr.mxu0 0.0
  %480 = vmatpush1.msra.mxu0 0.0
  %481 = vmatprep.mubr.f32.mxu0 0.0
  %482 = vmatmul.mubr.f32.gmra.mrb[0].mxu0 %v353
  %v483 = vpop.f32.mrb[0].mxu0
  %v484 = vadd.f32 0.0, %v483
  %v485 = vpop.f32.mrb[0].mxu0
  %486 = vmatprep.mubr.f32.mxu0 0.0
  %487 = vmatmul.mubr.f32.gmra.mrb[0].mxu0 %v354
  %v488 = vpop.f32.mrb[0].mxu0
  %v489 = vadd.f32 0.0, %v488
  %v490 = vpop.f32.mrb[0].mxu0
  %491 = vmatprep.mubr.f32.mxu0 0.0
  %492 = vmatmul.mubr.f32.gmra.mrb[0].mxu0 %v355
  %v493 = vpop.f32.mrb[0].mxu0
  %v494 = vadd.f32 0.0, %v493
  %v495 = vpop.f32.mrb[0].mxu0
  %496 = vmatprep.mubr.f32.mxu0 0.0
  %497 = vmatmul.mubr.f32.gmra.mrb[0].mxu0 %v356
  %v498 = vpop.f32.mrb[0].mxu0
  %v499 = vadd.f32 0.0, %v498
  %v500 = vpop.f32.mrb[0].mxu0
  %501 = vmatprep.mubr.f32.mxu0 0.0
  %502 = vmatmul.mubr.f32.gmra.mrb[0].mxu0 %v357
  %v503 = vpop.f32.mrb[0].mxu0
  %v504 = vadd.f32 0.0, %v503
  %v505 = vpop.f32.mrb[0].mxu0
  %506 = vmatprep.mubr.f32.mxu0 0.0
  %507 = vmatmul.mubr.f32.gmra.mrb[0].mxu0 %v358
  %v508 = vpop.f32.mrb[0].mxu0
  %v509 = vadd.f32 0.0, %v508
  %v510 = vpop.f32.mrb[0].mxu0
  %511 = vmatprep.mubr.f32.mxu0 0.0
  %512 = vmatmul.mubr.f32.gmra.mrb[0].mxu0 %v359
  %v513 = vpop.f32.mrb[0].mxu0
  %v514 = vadd.f32 0.0, %v513
  %v515 = vpop.f32.mrb[0].mxu0
  %516 = vmatprep.mubr.f32.mxu0 0.0
  %517 = vmatmul.mubr.f32.gmra.mrb[0].mxu0 %v360
  %v518 = vpop.f32.mrb[0].mxu0
  %v519 = vadd.f32 0.0, %v518
  %v520 = vpop.f32.mrb[0].mxu0
  %521 = vmatprep.mubr.f32.mxu0 0.0
  %522 = vmatmul.mubr.f32.gmra.mrb[0].mxu0 %v361
  %v523 = vpop.f32.mrb[0].mxu0
  %v524 = vadd.f32 0.0, %v523
  %v525 = vpop.f32.mrb[0].mxu0
  %526 = vmatprep.mubr.f32.mxu0 0.0
  %527 = vmatmul.mubr.f32.gmra.mrb[0].mxu0 %v362
  %v528 = vpop.f32.mrb[0].mxu0
  %v529 = vadd.f32 0.0, %v528
  %v530 = vpop.f32.mrb[0].mxu0
  %531 = vmatprep.mubr.f32.mxu0 0.0
  %532 = vmatmul.mubr.f32.gmra.mrb[0].mxu0 %v363
  %v533 = vpop.f32.mrb[0].mxu0
  %v534 = vadd.f32 0.0, %v533
  %v535 = vpop.f32.mrb[0].mxu0
  %536 = vmatprep.mubr.f32.mxu0 0.0
  %537 = vmatmul.mubr.f32.gmra.mrb[0].mxu0 %v364
  %v538 = vpop.f32.mrb[0].mxu0
  %v539 = vadd.f32 0.0, %v538
  %v540 = vpop.f32.mrb[0].mxu0
  %541 = vmatprep.mubr.f32.mxu0 0.0
  %542 = vmatmul.mubr.f32.gmra.mrb[0].mxu0 %v365
  %v543 = vpop.f32.mrb[0].mxu0
  %v544 = vadd.f32 0.0, %v543
  %v545 = vpop.f32.mrb[0].mxu0
  %546 = vmatprep.mubr.f32.mxu0 0.0
  %547 = vmatmul.mubr.f32.gmra.mrb[0].mxu0 %v366
  %v548 = vpop.f32.mrb[0].mxu0
  %v549 = vadd.f32 0.0, %v548
  %v550 = vpop.f32.mrb[0].mxu0
  %551 = vmatprep.mubr.f32.mxu0 0.0
  %552 = vmatmul.mubr.f32.gmra.mrb[0].mxu0 %v367
  %v553 = vpop.f32.mrb[0].mxu0
  %v554 = vadd.f32 0.0, %v553
  %v555 = vpop.f32.mrb[0].mxu0
  %556 = vmatprep.mubr.f32.mxu0 0.0
  %557 = vmatmul.mubr.f32.gmra.mrb[0].mxu0 %v368
  %v558 = vpop.f32.mrb[0].mxu0
  %v559 = vadd.f32 0.0, %v558
  %v560 = vpop.f32.mrb[0].mxu0
  %561 = vmatprep.mubr.f32.mxu0 0.0
  %562 = vmatmul.mubr.f32.gmra.mrb[0].mxu0 %v369
  %v563 = vpop.f32.mrb[0].mxu0
  %v564 = vadd.f32 0.0, %v563
  %v565 = vpop.f32.mrb[0].mxu0
  %566 = vmatprep.mubr.f32.mxu0 0.0
  %567 = vmatmul.mubr.f32.gmra.mrb[0].mxu0 %v370
  %v568 = vpop.f32.mrb[0].mxu0
  %v569 = vadd.f32 0.0, %v568
  %v570 = vpop.f32.mrb[0].mxu0
  %571 = vmatprep.mubr.f32.mxu0 0.0
  %572 = vmatmul.mubr.f32.gmra.mrb[0].mxu0 %v371
  %v573 = vpop.f32.mrb[0].mxu0
  %v574 = vadd.f32 0.0, %v573
  %v575 = vpop.f32.mrb[0].mxu0
  %576 = vmatprep.mubr.f32.mxu0 0.0
  %577 = vmatmul.mubr.f32.gmra.mrb[0].mxu0 %v372
  %v578 = vpop.f32.mrb[0].mxu0
  %v579 = vadd.f32 0.0, %v578
  %v580 = vpop.f32.mrb[0].mxu0
  %581 = vmatprep.mubr.f32.mxu0 0.0
  %582 = vmatmul.mubr.f32.gmra.mrb[0].mxu0 %v373
  %v583 = vpop.f32.mrb[0].mxu0
  %v584 = vadd.f32 0.0, %v583
  %v585 = vpop.f32.mrb[0].mxu0
  %586 = vmatprep.mubr.f32.mxu0 0.0
  %587 = vmatmul.mubr.f32.gmra.mrb[0].mxu0 %v374
  %v588 = vpop.f32.mrb[0].mxu0
  %v589 = vadd.f32 0.0, %v588
  %v590 = vpop.f32.mrb[0].mxu0
  %591 = vmatprep.mubr.f32.mxu0 0.0
  %592 = vmatmul.mubr.f32.gmra.mrb[0].mxu0 %v375
  %v593 = vpop.f32.mrb[0].mxu0
  %v594 = vadd.f32 0.0, %v593
  %v595 = vpop.f32.mrb[0].mxu0
  %596 = vmatprep.mubr.f32.mxu0 0.0
  %597 = vmatmul.mubr.f32.gmra.mrb[0].mxu0 %v376
  %v598 = vpop.f32.mrb[0].mxu0
  %v599 = vadd.f32 0.0, %v598
  %v600 = vpop.f32.mrb[0].mxu0
  %601 = vmatprep.mubr.f32.mxu0 0.0
  %602 = vmatmul.mubr.f32.gmra.mrb[0].mxu0 %v377
  %v603 = vpop.f32.mrb[0].mxu0
  %v604 = vadd.f32 0.0, %v603
  %v605 = vpop.f32.mrb[0].mxu0
  %606 = vmatprep.mubr.f32.mxu0 0.0
  %607 = vmatmul.mubr.f32.gmra.mrb[0].mxu0 %v378
  %v608 = vpop.f32.mrb[0].mxu0
  %v609 = vadd.f32 0.0, %v608
  %v610 = vpop.f32.mrb[0].mxu0
  %611 = vmatprep.mubr.f32.mxu0 0.0
  %612 = vmatmul.mubr.f32.gmra.mrb[0].mxu0 %v379
  %v613 = vpop.f32.mrb[0].mxu0
  %v614 = vadd.f32 0.0, %v613
  %v615 = vpop.f32.mrb[0].mxu0
  %616 = vmatprep.mubr.f32.mxu0 0.0
  %617 = vmatmul.mubr.f32.gmra.mrb[0].mxu0 %v380
  %v618 = vpop.f32.mrb[0].mxu0
  %v619 = vadd.f32 0.0, %v618
  %v620 = vpop.f32.mrb[0].mxu0
  %621 = vmatprep.mubr.f32.mxu0 0.0
  %622 = vmatmul.mubr.f32.gmra.mrb[0].mxu0 %v381
  %v623 = vpop.f32.mrb[0].mxu0
  %v624 = vadd.f32 0.0, %v623
  %v625 = vpop.f32.mrb[0].mxu0
  %626 = vmatprep.mubr.f32.mxu0 0.0
  %627 = vmatmul.mubr.f32.gmra.mrb[0].mxu0 %v382
  %v628 = vpop.f32.mrb[0].mxu0
  %v629 = vadd.f32 0.0, %v628
  %v630 = vpop.f32.mrb[0].mxu0
  %631 = vmatprep.mubr.f32.mxu0 0.0
  %632 = vmatmul.mubr.f32.gmra.mrb[0].mxu0 %v383
  %v633 = vpop.f32.mrb[0].mxu0
  %v634 = vadd.f32 0.0, %v633
  %v635 = vpop.f32.mrb[0].mxu0
  %636 = vmatprep.mubr.f32.mxu0 0.0
  %637 = vmatmul.mubr.f32.gmra.mrb[0].mxu0 %v384
  %v638 = vpop.f32.mrb[0].mxu0
  %v639 = vadd.f32 0.0, %v638
  %v640 = vpop.f32.mrb[0].mxu0
  %641 = vdwg.mxu0
  %643 = vset.pattern.permute.xlu0 0
  %644 = vperm.xlu0 %643, %v385
  %v645 = vpop.permute.xlu0 %644
  %648 = vset.pattern.permute.xlu0 0
  %649 = vperm.xlu0 %648, %v386
  %v650 = vpop.permute.xlu0 %649
  %653 = vset.pattern.permute.xlu0 0
  %654 = vperm.xlu0 %653, %v387
  %v655 = vpop.permute.xlu0 %654
  %658 = vset.pattern.permute.xlu0 0
  %659 = vperm.xlu0 %658, %v388
  %v660 = vpop.permute.xlu0 %659
  %663 = vset.pattern.permute.xlu0 0
  %664 = vperm.xlu0 %663, %v389
  %v665 = vpop.permute.xlu0 %664
  %668 = vset.pattern.permute.xlu0 0
  %669 = vperm.xlu0 %668, %v390
  %v670 = vpop.permute.xlu0 %669
  %673 = vset.pattern.permute.xlu0 0
  %674 = vperm.xlu0 %673, %v391
  %v675 = vpop.permute.xlu0 %674
  %678 = vset.pattern.permute.xlu0 0
  %679 = vperm.xlu0 %678, %v392
  %v680 = vpop.permute.xlu0 %679
  %683 = vset.pattern.permute.xlu0 0
  %684 = vperm.xlu0 %683, %v393
  %v685 = vpop.permute.xlu0 %684
  %688 = vset.pattern.permute.xlu0 0
  %689 = vperm.xlu0 %688, %v394
  %v690 = vpop.permute.xlu0 %689
  %693 = vset.pattern.permute.xlu0 0
  %694 = vperm.xlu0 %693, %v395
  %v695 = vpop.permute.xlu0 %694
  %698 = vset.pattern.permute.xlu0 0
  %699 = vperm.xlu0 %698, %v396
  %v700 = vpop.permute.xlu0 %699
  %703 = vset.pattern.permute.xlu0 0
  %704 = vperm.xlu0 %703, %v397
  %v705 = vpop.permute.xlu0 %704
  %708 = vset.pattern.permute.xlu0 0
  %709 = vperm.xlu0 %708, %v398
  %v710 = vpop.permute.xlu0 %709
  %713 = vset.pattern.permute.xlu0 0
  %714 = vperm.xlu0 %713, %v399
  %v715 = vpop.permute.xlu0 %714
  %718 = vset.pattern.permute.xlu0 0
  %719 = vperm.xlu0 %718, %v400
  %v720 = vpop.permute.xlu0 %719
  %723 = vset.pattern.permute.xlu0 0
  %724 = vperm.xlu0 %723, %v401
  %v725 = vpop.permute.xlu0 %724
  %728 = vset.pattern.permute.xlu0 0
  %729 = vperm.xlu0 %728, %v402
  %v730 = vpop.permute.xlu0 %729
  %733 = vset.pattern.permute.xlu0 0
  %734 = vperm.xlu0 %733, %v403
  %v735 = vpop.permute.xlu0 %734
  %738 = vset.pattern.permute.xlu0 0
  %739 = vperm.xlu0 %738, %v404
  %v740 = vpop.permute.xlu0 %739
  %743 = vset.pattern.permute.xlu0 0
  %744 = vperm.xlu0 %743, %v405
  %v745 = vpop.permute.xlu0 %744
  %748 = vset.pattern.permute.xlu0 0
  %749 = vperm.xlu0 %748, %v406
  %v750 = vpop.permute.xlu0 %749
  %753 = vset.pattern.permute.xlu0 0
  %754 = vperm.xlu0 %753, %v407
  %v755 = vpop.permute.xlu0 %754
  %758 = vset.pattern.permute.xlu0 0
  %759 = vperm.xlu0 %758, %v408
  %v760 = vpop.permute.xlu0 %759
  %763 = vset.pattern.permute.xlu0 0
  %764 = vperm.xlu0 %763, %v409
  %v765 = vpop.permute.xlu0 %764
  %768 = vset.pattern.permute.xlu0 0
  %769 = vperm.xlu0 %768, %v410
  %v770 = vpop.permute.xlu0 %769
  %773 = vset.pattern.permute.xlu0 0
  %774 = vperm.xlu0 %773, %v411
  %v775 = vpop.permute.xlu0 %774
  %778 = vset.pattern.permute.xlu0 0
  %779 = vperm.xlu0 %778, %v412
  %v780 = vpop.permute.xlu0 %779
  %783 = vset.pattern.permute.xlu0 0
  %784 = vperm.xlu0 %783, %v413
  %v785 = vpop.permute.xlu0 %784
  %788 = vset.pattern.permute.xlu0 0
  %789 = vperm.xlu0 %788, %v414
  %v790 = vpop.permute.xlu0 %789
  %793 = vset.pattern.permute.xlu0 0
  %794 = vperm.xlu0 %793, %v415
  %v795 = vpop.permute.xlu0 %794
  %798 = vset.pattern.permute.xlu0 0
  %799 = vperm.xlu0 %798, %v416
  %v800 = vpop.permute.xlu0 %799
  %v802 = vadd.f32 %v645, %v484
  %v803 = vadd.f32 %v650, %v489
  %v804 = vadd.f32 %v655, %v494
  %v805 = vadd.f32 %v660, %v499
  %v806 = vadd.f32 %v665, %v504
  %v807 = vadd.f32 %v670, %v509
  %v808 = vadd.f32 %v675, %v514
  %v809 = vadd.f32 %v680, %v519
  %v810 = vadd.f32 %v685, %v524
  %v811 = vadd.f32 %v690, %v529
  %v812 = vadd.f32 %v695, %v534
  %v813 = vadd.f32 %v700, %v539
  %v814 = vadd.f32 %v705, %v544
  %v815 = vadd.f32 %v710, %v549
  %v816 = vadd.f32 %v715, %v554
  %v817 = vadd.f32 %v720, %v559
  %v818 = vadd.f32 %v725, %v564
  %v819 = vadd.f32 %v730, %v569
  %v820 = vadd.f32 %v735, %v574
  %v821 = vadd.f32 %v740, %v579
  %v822 = vadd.f32 %v745, %v584
  %v823 = vadd.f32 %v750, %v589
  %v824 = vadd.f32 %v755, %v594
  %v825 = vadd.f32 %v760, %v599
  %v826 = vadd.f32 %v765, %v604
  %v827 = vadd.f32 %v770, %v609
  %v828 = vadd.f32 %v775, %v614
  %v829 = vadd.f32 %v780, %v619
  %v830 = vadd.f32 %v785, %v624
  %v831 = vadd.f32 %v790, %v629
  %v832 = vadd.f32 %v795, %v634
  %v833 = vadd.f32 %v800, %v639
  %vm834 = vcmp.lt.f32.partialorder %v802, inf
  %v835 = vsel %vm834, %v802, inf
  %vm836 = vcmp.lt.f32.partialorder %v803, %v835
  %v837 = vsel %vm836, %v803, %v835
  %v838 = vsel %vm836, 1, 0
  %vm839 = vcmp.lt.f32.partialorder %v804, %v837
  %v840 = vsel %vm839, %v804, %v837
  %v841 = vsel %vm839, 2, %v838
  %vm842 = vcmp.lt.f32.partialorder %v805, %v840
  %v843 = vsel %vm842, %v805, %v840
  %v844 = vsel %vm842, 3, %v841
  %vm845 = vcmp.lt.f32.partialorder %v806, %v843
  %v846 = vsel %vm845, %v806, %v843
  %v847 = vsel %vm845, 4, %v844
  %vm848 = vcmp.lt.f32.partialorder %v807, %v846
  %v849 = vsel %vm848, %v807, %v846
  %v850 = vsel %vm848, 5, %v847
  %vm851 = vcmp.lt.f32.partialorder %v808, %v849
  %v852 = vsel %vm851, %v808, %v849
  %v853 = vsel %vm851, 6, %v850
  %vm854 = vcmp.lt.f32.partialorder %v809, %v852
  %v855 = vsel %vm854, %v809, %v852
  %v856 = vsel %vm854, 7, %v853
  %vm857 = vcmp.lt.f32.partialorder %v810, %v855
  %v858 = vsel %vm857, %v810, %v855
  %v859 = vsel %vm857, 8, %v856
  %vm860 = vcmp.lt.f32.partialorder %v811, %v858
  %v861 = vsel %vm860, %v811, %v858
  %v862 = vsel %vm860, 9, %v859
  %vm863 = vcmp.lt.f32.partialorder %v812, %v861
  %v864 = vsel %vm863, %v812, %v861
  %v865 = vsel %vm863, 10, %v862
  %vm866 = vcmp.lt.f32.partialorder %v813, %v864
  %v867 = vsel %vm866, %v813, %v864
  %v868 = vsel %vm866, 11, %v865
  %vm869 = vcmp.lt.f32.partialorder %v814, %v867
  %v870 = vsel %vm869, %v814, %v867
  %v871 = vsel %vm869, 12, %v868
  %vm872 = vcmp.lt.f32.partialorder %v815, %v870
  %v873 = vsel %vm872, %v815, %v870
  %v874 = vsel %vm872, 13, %v871
  %vm875 = vcmp.lt.f32.partialorder %v816, %v873
  %v876 = vsel %vm875, %v816, %v873
  %v877 = vsel %vm875, 14, %v874
  %vm878 = vcmp.lt.f32.partialorder %v817, %v876
  %v879 = vsel %vm878, %v817, %v876
  %v880 = vsel %vm878, 15, %v877
  %vm881 = vcmp.lt.f32.partialorder %v818, %v879
  %v882 = vsel %vm881, %v818, %v879
  %v883 = vsel %vm881, 16, %v880
  %vm884 = vcmp.lt.f32.partialorder %v819, %v882
  %v885 = vsel %vm884, %v819, %v882
  %v886 = vsel %vm884, 17, %v883
  %vm887 = vcmp.lt.f32.partialorder %v820, %v885
  %v888 = vsel %vm887, %v820, %v885
  %v889 = vsel %vm887, 18, %v886
  %vm890 = vcmp.lt.f32.partialorder %v821, %v888
  %v891 = vsel %vm890, %v821, %v888
  %v892 = vsel %vm890, 19, %v889
  %vm893 = vcmp.lt.f32.partialorder %v822, %v891
  %v894 = vsel %vm893, %v822, %v891
  %v895 = vsel %vm893, 20, %v892
  %vm896 = vcmp.lt.f32.partialorder %v823, %v894
  %v897 = vsel %vm896, %v823, %v894
  %v898 = vsel %vm896, 21, %v895
  %vm899 = vcmp.lt.f32.partialorder %v824, %v897
  %v900 = vsel %vm899, %v824, %v897
  %v901 = vsel %vm899, 22, %v898
  %vm902 = vcmp.lt.f32.partialorder %v825, %v900
  %v903 = vsel %vm902, %v825, %v900
  %v904 = vsel %vm902, 23, %v901
  %vm905 = vcmp.lt.f32.partialorder %v826, %v903
  %v906 = vsel %vm905, %v826, %v903
  %v907 = vsel %vm905, 24, %v904
  %vm908 = vcmp.lt.f32.partialorder %v827, %v906
  %v909 = vsel %vm908, %v827, %v906
  %v910 = vsel %vm908, 25, %v907
  %vm911 = vcmp.lt.f32.partialorder %v828, %v909
  %v912 = vsel %vm911, %v828, %v909
  %v913 = vsel %vm911, 26, %v910
  %vm914 = vcmp.lt.f32.partialorder %v829, %v912
  %v915 = vsel %vm914, %v829, %v912
  %v916 = vsel %vm914, 27, %v913
  %vm917 = vcmp.lt.f32.partialorder %v830, %v915
  %v918 = vsel %vm917, %v830, %v915
  %v919 = vsel %vm917, 28, %v916
  %vm920 = vcmp.lt.f32.partialorder %v831, %v918
  %v921 = vsel %vm920, %v831, %v918
  %v922 = vsel %vm920, 29, %v919
  %vm923 = vcmp.lt.f32.partialorder %v832, %v921
  %v924 = vsel %vm923, %v832, %v921
  %v925 = vsel %vm923, 30, %v922
  %vm926 = vcmp.lt.f32.partialorder %v833, %v924
  %v927 = vsel %vm926, %v833, %v924
  %v928 = vsel %vm926, 31, %v925
  %v929 = vlaneseq
  %v930 = vshrl.u32 %v929, 7
  %v931 = vmul.u32 %v928, 8
  %v932 = vadd.s32 %v931, %v930
  %v933 = vrot.slane %v927, 4
  %v934 = vmin.f32 %v927, %v933
  %v935 = vrot.slane %v934, 2
  %v936 = vmin.f32 %v934, %v935
  %v937 = vrot.slane %v936, 1
  %v938 = vmin.f32 %v936, %v937
  %vm939 = vcmp.eq.f32.partialorder %v927, %v938
  %v940 = vsel %vm939, %v932, 1073741824
  %v941 = vrot.slane %v940, 4
  %vm942 = vcmp.lt.s32.totalorder %v940, %v941
  %v943 = vsel %vm942, %v940, %v941
  %v944 = vrot.slane %v943, 2
  %vm945 = vcmp.lt.s32.totalorder %v943, %v944
  %v946 = vsel %vm945, %v943, %v944
  %v947 = vrot.slane %v946, 1
  %vm948 = vcmp.lt.s32.totalorder %v946, %v947
  %v949 = vsel %vm948, %v946, %v947
  %v950 = vadd.s32 %v930, 8
  %v951 = vadd.s32 %v930, 16
  %v952 = vadd.s32 %v930, 24
  %v953 = vadd.s32 %v930, 32
  %v954 = vadd.s32 %v930, 40
  %v955 = vadd.s32 %v930, 48
  %v956 = vadd.s32 %v930, 56
  %v957 = vadd.s32 %v930, 64
  %v958 = vadd.s32 %v930, 72
  %v959 = vadd.s32 %v930, 80
  %v960 = vadd.s32 %v930, 88
  %v961 = vadd.s32 %v930, 96
  %v962 = vadd.s32 %v930, 104
  %v963 = vadd.s32 %v930, 112
  %v964 = vadd.s32 %v930, 120
  %v965 = vadd.s32 %v930, 128
  %v966 = vadd.s32 %v930, 136
  %v967 = vadd.s32 %v930, 144
  %v968 = vadd.s32 %v930, 152
  %v969 = vadd.s32 %v930, 160
  %v970 = vadd.s32 %v930, 168
  %v971 = vadd.s32 %v930, 176
  %v972 = vadd.s32 %v930, 184
  %v973 = vadd.s32 %v930, 192
  %v974 = vadd.s32 %v930, 200
  %v975 = vadd.s32 %v930, 208
  %v976 = vadd.s32 %v930, 216
  %v977 = vadd.s32 %v930, 224
  %v978 = vadd.s32 %v930, 232
  %v979 = vadd.s32 %v930, 240
  %v980 = vadd.s32 %v930, 248
  %vm981 = vcmp.eq.s32.totalorder %v930, %v949
  %vm982 = vcmp.eq.s32.totalorder %v950, %v949
  %vm983 = vcmp.eq.s32.totalorder %v951, %v949
  %vm984 = vcmp.eq.s32.totalorder %v952, %v949
  %vm985 = vcmp.eq.s32.totalorder %v953, %v949
  %vm986 = vcmp.eq.s32.totalorder %v954, %v949
  %vm987 = vcmp.eq.s32.totalorder %v955, %v949
  %vm988 = vcmp.eq.s32.totalorder %v956, %v949
  %vm989 = vcmp.eq.s32.totalorder %v957, %v949
  %vm990 = vcmp.eq.s32.totalorder %v958, %v949
  %vm991 = vcmp.eq.s32.totalorder %v959, %v949
  %vm992 = vcmp.eq.s32.totalorder %v960, %v949
  %vm993 = vcmp.eq.s32.totalorder %v961, %v949
  %vm994 = vcmp.eq.s32.totalorder %v962, %v949
  %vm995 = vcmp.eq.s32.totalorder %v963, %v949
  %vm996 = vcmp.eq.s32.totalorder %v964, %v949
  %vm997 = vcmp.eq.s32.totalorder %v965, %v949
  %vm998 = vcmp.eq.s32.totalorder %v966, %v949
  %vm999 = vcmp.eq.s32.totalorder %v967, %v949
  %vm1000 = vcmp.eq.s32.totalorder %v968, %v949
  %vm1001 = vcmp.eq.s32.totalorder %v969, %v949
  %vm1002 = vcmp.eq.s32.totalorder %v970, %v949
  %vm1003 = vcmp.eq.s32.totalorder %v971, %v949
  %vm1004 = vcmp.eq.s32.totalorder %v972, %v949
  %vm1005 = vcmp.eq.s32.totalorder %v973, %v949
  %vm1006 = vcmp.eq.s32.totalorder %v974, %v949
  %vm1007 = vcmp.eq.s32.totalorder %v975, %v949
  %vm1008 = vcmp.eq.s32.totalorder %v976, %v949
  %vm1009 = vcmp.eq.s32.totalorder %v977, %v949
  %vm1010 = vcmp.eq.s32.totalorder %v978, %v949
  %vm1011 = vcmp.eq.s32.totalorder %v979, %v949
  %vm1012 = vcmp.eq.s32.totalorder %v980, %v949
  %v1013 = vsel %vm981, 1, 0
  %v1014 = vsel %vm982, 1, 0
  %v1015 = vsel %vm983, 1, 0
  %v1016 = vsel %vm984, 1, 0
  %v1017 = vsel %vm985, 1, 0
  %v1018 = vsel %vm986, 1, 0
  %v1019 = vsel %vm987, 1, 0
  %v1020 = vsel %vm988, 1, 0
  %v1021 = vsel %vm989, 1, 0
  %v1022 = vsel %vm990, 1, 0
  %v1023 = vsel %vm991, 1, 0
  %v1024 = vsel %vm992, 1, 0
  %v1025 = vsel %vm993, 1, 0
  %v1026 = vsel %vm994, 1, 0
  %v1027 = vsel %vm995, 1, 0
  %v1028 = vsel %vm996, 1, 0
  %v1029 = vsel %vm997, 1, 0
  %v1030 = vsel %vm998, 1, 0
  %v1031 = vsel %vm999, 1, 0
  %v1032 = vsel %vm1000, 1, 0
  %v1033 = vsel %vm1001, 1, 0
  %v1034 = vsel %vm1002, 1, 0
  %v1035 = vsel %vm1003, 1, 0
  %v1036 = vsel %vm1004, 1, 0
  %v1037 = vsel %vm1005, 1, 0
  %v1038 = vsel %vm1006, 1, 0
  %v1039 = vsel %vm1007, 1, 0
  %v1040 = vsel %vm1008, 1, 0
  %v1041 = vsel %vm1009, 1, 0
  %v1042 = vsel %vm1010, 1, 0
  %v1043 = vsel %vm1011, 1, 0
  %v1044 = vsel %vm1012, 1, 0
  %v1045 = vcvt.s32.f32 %v1013
  %v1046 = vcvt.s32.f32 %v1014
  %v1047 = vcvt.s32.f32 %v1015
  %v1048 = vcvt.s32.f32 %v1016
  %v1049 = vcvt.s32.f32 %v1017
  %v1050 = vcvt.s32.f32 %v1018
  %v1051 = vcvt.s32.f32 %v1019
  %v1052 = vcvt.s32.f32 %v1020
  %v1053 = vcvt.s32.f32 %v1021
  %v1054 = vcvt.s32.f32 %v1022
  %v1055 = vcvt.s32.f32 %v1023
  %v1056 = vcvt.s32.f32 %v1024
  %v1057 = vcvt.s32.f32 %v1025
  %v1058 = vcvt.s32.f32 %v1026
  %v1059 = vcvt.s32.f32 %v1027
  %v1060 = vcvt.s32.f32 %v1028
  %v1061 = vcvt.s32.f32 %v1029
  %v1062 = vcvt.s32.f32 %v1030
  %v1063 = vcvt.s32.f32 %v1031
  %v1064 = vcvt.s32.f32 %v1032
  %v1065 = vcvt.s32.f32 %v1033
  %v1066 = vcvt.s32.f32 %v1034
  %v1067 = vcvt.s32.f32 %v1035
  %v1068 = vcvt.s32.f32 %v1036
  %v1069 = vcvt.s32.f32 %v1037
  %v1070 = vcvt.s32.f32 %v1038
  %v1071 = vcvt.s32.f32 %v1039
  %v1072 = vcvt.s32.f32 %v1040
  %v1073 = vcvt.s32.f32 %v1041
  %v1074 = vcvt.s32.f32 %v1042
  %v1075 = vcvt.s32.f32 %v1043
  %v1076 = vcvt.s32.f32 %v1044
  %v1077 = vld [vmem:[%s4] sm:$0xff]
  %v1078 = vld [vmem:[%s4 + $0x8] sm:$0xff]
  %v1079 = vld [vmem:[%s4 + $0x10] sm:$0xff]
  %v1080 = vld [vmem:[%s4 + $0x18] sm:$0xff]
  %v1081 = vld [vmem:[%s4 + $0x20] sm:$0xff]
  %v1082 = vld [vmem:[%s4 + $0x28] sm:$0xff]
  %v1083 = vld [vmem:[%s4 + $0x30] sm:$0xff]
  %v1084 = vld [vmem:[%s4 + $0x38] sm:$0xff]
  %v1085 = vld [vmem:[%s4 + $0x40] sm:$0xff]
  %v1086 = vld [vmem:[%s4 + $0x48] sm:$0xff]
  %v1087 = vld [vmem:[%s4 + $0x50] sm:$0xff]
  %v1088 = vld [vmem:[%s4 + $0x58] sm:$0xff]
  %v1089 = vld [vmem:[%s4 + $0x60] sm:$0xff]
  %v1090 = vld [vmem:[%s4 + $0x68] sm:$0xff]
  %v1091 = vld [vmem:[%s4 + $0x70] sm:$0xff]
  %v1092 = vld [vmem:[%s4 + $0x78] sm:$0xff]
  %v1093 = vld [vmem:[%s4 + $0x80] sm:$0xff]
  %v1094 = vld [vmem:[%s4 + $0x88] sm:$0xff]
  %v1095 = vld [vmem:[%s4 + $0x90] sm:$0xff]
  %v1096 = vld [vmem:[%s4 + $0x98] sm:$0xff]
  %v1097 = vld [vmem:[%s4 + $0xa0] sm:$0xff]
  %v1098 = vld [vmem:[%s4 + $0xa8] sm:$0xff]
  %v1099 = vld [vmem:[%s4 + $0xb0] sm:$0xff]
  %v1100 = vld [vmem:[%s4 + $0xb8] sm:$0xff]
  %v1101 = vld [vmem:[%s4 + $0xc0] sm:$0xff]
  %v1102 = vld [vmem:[%s4 + $0xc8] sm:$0xff]
  %v1103 = vld [vmem:[%s4 + $0xd0] sm:$0xff]
  %v1104 = vld [vmem:[%s4 + $0xd8] sm:$0xff]
  %v1105 = vld [vmem:[%s4 + $0xe0] sm:$0xff]
  %v1106 = vld [vmem:[%s4 + $0xe8] sm:$0xff]
  %v1107 = vld [vmem:[%s4 + $0xf0] sm:$0xff]
  %v1108 = vld [vmem:[%s4 + $0xf8] sm:$0xff]
  %1109 = vmatprep.subr.mxu0 0.0
  %1110 = vmatpush1.msra.mxu0 %v1045
  %1111 = vmatprep.subr.mxu0 0.0
  %1112 = vmatpush1.msra.mxu0 %v1046
  %1113 = vmatprep.subr.mxu0 0.0
  %1114 = vmatpush1.msra.mxu0 %v1047
  %1115 = vmatprep.subr.mxu0 0.0
  %1116 = vmatpush1.msra.mxu0 %v1048
  %1117 = vmatprep.subr.mxu0 0.0
  %1118 = vmatpush1.msra.mxu0 %v1049
  %1119 = vmatprep.subr.mxu0 0.0
  %1120 = vmatpush1.msra.mxu0 %v1050
  %1121 = vmatprep.subr.mxu0 0.0
  %1122 = vmatpush1.msra.mxu0 %v1051
  %1123 = vmatprep.subr.mxu0 0.0
  %1124 = vmatpush1.msra.mxu0 %v1052
  %1125 = vmatprep.subr.mxu0 0.0
  %1126 = vmatpush1.msra.mxu0 %v1053
  %1127 = vmatprep.subr.mxu0 0.0
  %1128 = vmatpush1.msra.mxu0 %v1054
  %1129 = vmatprep.subr.mxu0 0.0
  %1130 = vmatpush1.msra.mxu0 %v1055
  %1131 = vmatprep.subr.mxu0 0.0
  %1132 = vmatpush1.msra.mxu0 %v1056
  %1133 = vmatprep.subr.mxu0 0.0
  %1134 = vmatpush1.msra.mxu0 %v1057
  %1135 = vmatprep.subr.mxu0 0.0
  %1136 = vmatpush1.msra.mxu0 %v1058
  %1137 = vmatprep.subr.mxu0 0.0
  %1138 = vmatpush1.msra.mxu0 %v1059
  %1139 = vmatprep.subr.mxu0 0.0
  %1140 = vmatpush1.msra.mxu0 %v1060
  %1141 = vmatprep.subr.mxu0 0.0
  %1142 = vmatpush1.msra.mxu0 %v1061
  %1143 = vmatprep.subr.mxu0 0.0
  %1144 = vmatpush1.msra.mxu0 %v1062
  %1145 = vmatprep.subr.mxu0 0.0
  %1146 = vmatpush1.msra.mxu0 %v1063
  %1147 = vmatprep.subr.mxu0 0.0
  %1148 = vmatpush1.msra.mxu0 %v1064
  %1149 = vmatprep.subr.mxu0 0.0
  %1150 = vmatpush1.msra.mxu0 %v1065
  %1151 = vmatprep.subr.mxu0 0.0
  %1152 = vmatpush1.msra.mxu0 %v1066
  %1153 = vmatprep.subr.mxu0 0.0
  %1154 = vmatpush1.msra.mxu0 %v1067
  %1155 = vmatprep.subr.mxu0 0.0
  %1156 = vmatpush1.msra.mxu0 %v1068
  %1157 = vmatprep.subr.mxu0 0.0
  %1158 = vmatpush1.msra.mxu0 %v1069
  %1159 = vmatprep.subr.mxu0 0.0
  %1160 = vmatpush1.msra.mxu0 %v1070
  %1161 = vmatprep.subr.mxu0 0.0
  %1162 = vmatpush1.msra.mxu0 %v1071
  %1163 = vmatprep.subr.mxu0 0.0
  %1164 = vmatpush1.msra.mxu0 %v1072
  %1165 = vmatprep.subr.mxu0 0.0
  %1166 = vmatpush1.msra.mxu0 %v1073
  %1167 = vmatprep.subr.mxu0 0.0
  %1168 = vmatpush1.msra.mxu0 %v1074
  %1169 = vmatprep.subr.mxu0 0.0
  %1170 = vmatpush1.msra.mxu0 %v1075
  %1171 = vmatprep.subr.mxu0 0.0
  %1172 = vmatpush1.msra.mxu0 %v1076
  %1173 = vmatprep.mubr.f32.mxu0 %v1078
  %1174 = vmatmul.mubr.f32.gmra.mrb[0].mxu0 %v1077
  %v1175 = vpop.f32.mrb[0].mxu0
  %v1176 = vadd.f32 0.0, %v1175
  %v1177 = vpop.f32.mrb[0].mxu0
  %1178 = vmatprep.mubr.f32.mxu0 %v1080
  %1179 = vmatmul.mubr.f32.gmra.mrb[0].mxu0 %v1079
  %v1180 = vpop.f32.mrb[0].mxu0
  %v1181 = vadd.f32 0.0, %v1180
  %v1182 = vpop.f32.mrb[0].mxu0
  %1183 = vmatprep.mubr.f32.mxu0 %v1082
  %1184 = vmatmul.mubr.f32.gmra.mrb[0].mxu0 %v1081
  %v1185 = vpop.f32.mrb[0].mxu0
  %v1186 = vadd.f32 0.0, %v1185
  %v1187 = vpop.f32.mrb[0].mxu0
  %1188 = vmatprep.mubr.f32.mxu0 %v1084
  %1189 = vmatmul.mubr.f32.gmra.mrb[0].mxu0 %v1083
  %v1190 = vpop.f32.mrb[0].mxu0
  %v1191 = vadd.f32 0.0, %v1190
  %v1192 = vpop.f32.mrb[0].mxu0
  %1193 = vmatprep.mubr.f32.mxu0 %v1086
  %1194 = vmatmul.mubr.f32.gmra.mrb[0].mxu0 %v1085
  %v1195 = vpop.f32.mrb[0].mxu0
  %v1196 = vadd.f32 0.0, %v1195
  %v1197 = vpop.f32.mrb[0].mxu0
  %1198 = vmatprep.mubr.f32.mxu0 %v1088
  %1199 = vmatmul.mubr.f32.gmra.mrb[0].mxu0 %v1087
  %v1200 = vpop.f32.mrb[0].mxu0
  %v1201 = vadd.f32 0.0, %v1200
  %v1202 = vpop.f32.mrb[0].mxu0
  %1203 = vmatprep.mubr.f32.mxu0 %v1090
  %1204 = vmatmul.mubr.f32.gmra.mrb[0].mxu0 %v1089
  %v1205 = vpop.f32.mrb[0].mxu0
  %v1206 = vadd.f32 0.0, %v1205
  %v1207 = vpop.f32.mrb[0].mxu0
  %1208 = vmatprep.mubr.f32.mxu0 %v1092
  %1209 = vmatmul.mubr.f32.gmra.mrb[0].mxu0 %v1091
  %v1210 = vpop.f32.mrb[0].mxu0
  %v1211 = vadd.f32 0.0, %v1210
  %v1212 = vpop.f32.mrb[0].mxu0
  %1213 = vmatprep.mubr.f32.mxu0 %v1094
  %1214 = vmatmul.mubr.f32.gmra.mrb[0].mxu0 %v1093
  %v1215 = vpop.f32.mrb[0].mxu0
  %v1216 = vadd.f32 0.0, %v1215
  %v1217 = vpop.f32.mrb[0].mxu0
  %1218 = vmatprep.mubr.f32.mxu0 %v1096
  %1219 = vmatmul.mubr.f32.gmra.mrb[0].mxu0 %v1095
  %v1220 = vpop.f32.mrb[0].mxu0
  %v1221 = vadd.f32 0.0, %v1220
  %v1222 = vpop.f32.mrb[0].mxu0
  %1223 = vmatprep.mubr.f32.mxu0 %v1098
  %1224 = vmatmul.mubr.f32.gmra.mrb[0].mxu0 %v1097
  %v1225 = vpop.f32.mrb[0].mxu0
  %v1226 = vadd.f32 0.0, %v1225
  %v1227 = vpop.f32.mrb[0].mxu0
  %1228 = vmatprep.mubr.f32.mxu0 %v1100
  %1229 = vmatmul.mubr.f32.gmra.mrb[0].mxu0 %v1099
  %v1230 = vpop.f32.mrb[0].mxu0
  %v1231 = vadd.f32 0.0, %v1230
  %v1232 = vpop.f32.mrb[0].mxu0
  %1233 = vmatprep.mubr.f32.mxu0 %v1102
  %1234 = vmatmul.mubr.f32.gmra.mrb[0].mxu0 %v1101
  %v1235 = vpop.f32.mrb[0].mxu0
  %v1236 = vadd.f32 0.0, %v1235
  %v1237 = vpop.f32.mrb[0].mxu0
  %1238 = vmatprep.mubr.f32.mxu0 %v1104
  %1239 = vmatmul.mubr.f32.gmra.mrb[0].mxu0 %v1103
  %v1240 = vpop.f32.mrb[0].mxu0
  %v1241 = vadd.f32 0.0, %v1240
  %v1242 = vpop.f32.mrb[0].mxu0
  %1243 = vmatprep.mubr.f32.mxu0 %v1106
  %1244 = vmatmul.mubr.f32.gmra.mrb[0].mxu0 %v1105
  %v1245 = vpop.f32.mrb[0].mxu0
  %v1246 = vadd.f32 0.0, %v1245
  %v1247 = vpop.f32.mrb[0].mxu0
  %1248 = vmatprep.mubr.f32.mxu0 %v1108
  %1249 = vmatmul.mubr.f32.gmra.mrb[0].mxu0 %v1107
  %v1250 = vpop.f32.mrb[0].mxu0
  %v1251 = vadd.f32 0.0, %v1250
  %v1252 = vpop.f32.mrb[0].mxu0
  %1253 = vdwg.mxu0
  %1254 = vst [vmem:[%s6] sm:$0xff] %v1176
  %1255 = vst [vmem:[%s6 + $0x8] sm:$0xff] %v1181
  %1256 = vst [vmem:[%s6 + $0x10] sm:$0xff] %v1186
  %1257 = vst [vmem:[%s6 + $0x18] sm:$0xff] %v1191
  %1258 = vst [vmem:[%s6 + $0x20] sm:$0xff] %v1196
  %1259 = vst [vmem:[%s6 + $0x28] sm:$0xff] %v1201
  %1260 = vst [vmem:[%s6 + $0x30] sm:$0xff] %v1206
  %1261 = vst [vmem:[%s6 + $0x38] sm:$0xff] %v1211
  %1262 = vst [vmem:[%s6 + $0x40] sm:$0xff] %v1216
  %1263 = vst [vmem:[%s6 + $0x48] sm:$0xff] %v1221
  %1264 = vst [vmem:[%s6 + $0x50] sm:$0xff] %v1226
  %1265 = vst [vmem:[%s6 + $0x58] sm:$0xff] %v1231
  %1266 = vst [vmem:[%s6 + $0x60] sm:$0xff] %v1236
  %1267 = vst [vmem:[%s6 + $0x68] sm:$0xff] %v1241
  %1268 = vst [vmem:[%s6 + $0x70] sm:$0xff] %v1246
  %1269 = vst [vmem:[%s6 + $0x78] sm:$0xff] %v1251
  // Predicated region
  $region26: #{vqgan_vae_embed.1} parent=0 // pred_check
    _
  $region27: #{vqgan_vae_embed.1} parent=0 // pred_check_branch
    %1271 = sbr.rel (0) target = $region29
  $region28: #{vqgan_vae_embed.1} parent=0 // pred_region
    _
  $region29: #{vqgan_vae_embed.1} parent=0 // pred_fallthru
    _
  // Predicated region
  $region30: #{vqgan_vae_embed.1} parent=0 // pred_check
    _
  $region31: #{vqgan_vae_embed.1} parent=0 // pred_check_branch
    %1273 = sbr.rel (0) target = $region33
  $region32: #{vqgan_vae_embed.1} parent=0 // pred_region
    _
  $region33: #{vqgan_vae_embed.1} parent=0 // pred_fallthru
    _

</llo_original>
